<compile_context>
chip_gen: v7x
topology: tpu7x:2x2x1
jax: 0.10.0
libtpu: 0.0.40
codegen_flags: <defaults>
</compile_context>

<pallas_src>
import jax
import jax.numpy as jnp
from jax.experimental import pallas as pl
from jax.experimental.pallas import tpu as pltpu


def _round_up(x, m):
    return ((x + m - 1) // m) * m


def _vmem_limit_bytes():
    # ~75% of physical VMEM (v5e/v6e: 128 MiB -> 96 MiB, v7x: 64 MiB -> 48 MiB),
    # capped at 100 MiB.  Fall back to the v7x-safe 48 MiB if the query fails.
    try:
        cap = pltpu.get_tpu_info().vmem_capacity_bytes
        return int(min(100 * 1024 * 1024, cap * 3 // 4))
    except Exception:
        return 48 * 1024 * 1024


def _make_qkv_attn_kernel(num_heads, head_dim, attn_lanes, compute_dtype, with_attn):
    H, Dh = num_heads, head_dim
    E = H * Dh
    A = H * H
    cdt = compute_dtype

    def body(x_ref, wqkv_ref, bqkv_ref, gsum_ref, rep_ref, dsum_ref, bsum_ref,
             ctx_ref, attn_ref):
        # Fused QKV projection: (tm, E) @ (E, 3E) bf16 on the MXU, f32 accumulation.
        # The qk scale is already folded into the q columns of wqkv/bqkv.
        qkv = jnp.dot(x_ref[...], wqkv_ref[...],
                      preferred_element_type=jnp.float32) + bqkv_ref[...]
        q = qkv[:, 0 * E:1 * E]          # (tm, E), lane = h*Dh + d (q pre-scaled)
        k = qkv[:, 1 * E:2 * E]
        v = qkv[:, 2 * E:3 * E]

        # --- Scores for all heads, packed lane-dense: s[:, h*H+g] = q_h . k_g ---
        s_parts = []
        for h in range(H):               # H is a small compile-time constant
            q_h = q[:, h * Dh:(h + 1) * Dh]                   # (tm, Dh)
            prod = jnp.tile(q_h, (1, H)) * k                  # (tm, E) f32 VALU
            # Sum the Dh lanes of each key head on the MXU ((E, H) 0/1 matrix).
            s_parts.append(jnp.dot(prod.astype(cdt), gsum_ref[...],
                                   preferred_element_type=jnp.float32))
        s = jnp.concatenate(s_parts, axis=-1)                 # (tm, H*H) f32

        # --- Packed softmax: single per-row max / single exp over H*H lanes ---
        # (a constant per-row shift is valid for every head's softmax).
        s = s - jnp.max(s, axis=-1, keepdims=True)
        p = jnp.exp(s)
        # Per-head denominators broadcast back to lanes via one block-diagonal
        # ones matmul; normalize with the EUP approximate reciprocal.
        denom = jnp.dot(p.astype(cdt), bsum_ref[...],
                        preferred_element_type=jnp.float32)   # (tm, H*H)
        aprob = p * pl.reciprocal(denom, approx=True)         # (tm, H*H) f32

        if with_attn:
            if attn_lanes > A:           # pad so the attn store is lane-dense
                zeros = jnp.zeros((aprob.shape[0], attn_lanes - A), aprob.dtype)
                attn_out = jnp.concatenate([aprob, zeros], axis=-1)
            else:
                attn_out = aprob
            attn_ref[...] = attn_out.astype(attn_ref.dtype)

        # --- Context on the MXU: ctx_h[:, d] = sum_g attn[:, h*H+g] * v[:, g*Dh+d] ---
        ctx_parts = []
        for h in range(H):
            a_h = aprob[:, h * H:(h + 1) * H]                 # (tm, H)
            # Repeat each attn weight across its key head's Dh lanes ((H, E) 0/1).
            a_rep = jnp.dot(a_h.astype(cdt), rep_ref[...],
                            preferred_element_type=jnp.float32)   # (tm, E)
            w = a_rep * v                                     # (tm, E) f32 VALU
            # Contract over key heads with the (E, Dh) 0/1 lane-sum matrix.
            ctx_parts.append(jnp.dot(w.astype(cdt), dsum_ref[...],
                                     preferred_element_type=jnp.float32))
        ctx_ref[...] = jnp.concatenate(ctx_parts, axis=-1).astype(ctx_ref.dtype)

    if with_attn:
        def kernel(x_ref, wqkv_ref, bqkv_ref, gsum_ref, rep_ref, dsum_ref,
                   bsum_ref, ctx_ref, attn_ref):
            body(x_ref, wqkv_ref, bqkv_ref, gsum_ref, rep_ref, dsum_ref,
                 bsum_ref, ctx_ref, attn_ref)
    else:
        def kernel(x_ref, wqkv_ref, bqkv_ref, gsum_ref, rep_ref, dsum_ref,
                   bsum_ref, ctx_ref):
            body(x_ref, wqkv_ref, bqkv_ref, gsum_ref, rep_ref, dsum_ref,
                 bsum_ref, ctx_ref, None)
    return kernel


def _proj_kernel(x_ref, w_ref, b_ref, o_ref):
    acc = jnp.dot(x_ref[...], w_ref[...], preferred_element_type=jnp.float32)
    o_ref[...] = (acc + b_ref[...]).astype(o_ref.dtype)


def prepare_self_attention_params(w_qkv, b_qkv, w_proj, b_proj, *, num_heads,
                                  qk_scale=None, compute_dtype=jnp.bfloat16):
    """One-time weight prep (transpose / fold qk scale / cast) outside the call path.

    w_qkv: (3E, E) PyTorch layout; b_qkv: (3E,) or None; w_proj: (E, E); b_proj: (E,).
    """
    w_qkv = jnp.asarray(w_qkv, jnp.float32)
    w_proj = jnp.asarray(w_proj, jnp.float32)
    E = w_qkv.shape[1]
    H = num_heads
    if E % H != 0:
        raise ValueError("Embedding dimension must be divisible by number of heads.")
    Dh = E // H
    scale = float(qk_scale) if qk_scale is not None else float(Dh) ** -0.5

    wqkv_t = w_qkv.T                                       # (E, 3E): kernels do x @ W
    wqkv_t = wqkv_t.at[:, :E].multiply(scale)              # fold qk scale into q columns
    if b_qkv is None:
        bqkv = jnp.zeros((1, 3 * E), jnp.float32)
    else:
        bqkv = jnp.asarray(b_qkv, jnp.float32).reshape(1, 3 * E)
        bqkv = bqkv.at[:, :E].multiply(scale)

    # Small constant 0/1 matrices that move the per-token head reductions onto
    # the MXU (exact in bf16).
    e = jnp.arange(E)
    a = jnp.arange(H * H)
    gsum = (e[:, None] // Dh == jnp.arange(H)[None, :]).astype(compute_dtype)   # (E, H)
    rep = (jnp.arange(H)[:, None] == e[None, :] // Dh).astype(compute_dtype)    # (H, E)
    dsum = (e[:, None] % Dh == jnp.arange(Dh)[None, :]).astype(compute_dtype)   # (E, Dh)
    bsum = (a[:, None] // H == a[None, :] // H).astype(compute_dtype)           # (HH, HH)

    return dict(
        num_heads=H, head_dim=Dh, compute_dtype=compute_dtype,
        wqkv_t=wqkv_t.astype(compute_dtype),               # (E, 3E) bf16
        bqkv=bqkv,                                         # (1, 3E) f32 (post-MXU add)
        gsum=gsum, rep=rep, dsum=dsum, bsum=bsum,
        wproj_t=w_proj.T.astype(compute_dtype),            # (E, E) bf16
        bproj=jnp.asarray(b_proj, jnp.float32).reshape(1, E),
    )


def self_attention(x, params, *, return_attn=True, block_m=512):
    """x: (B, L, E). Returns (out, attn): out (B, L, E), attn (B, L, H, H) or None."""
    B, L, E = x.shape
    H = params["num_heads"]
    Dh = params["head_dim"]
    cdt = params["compute_dtype"]
    A = H * H
    A_pad = _round_up(A, 128)            # lane-dense attn writeback, sliced outside

    M = B * L
    # Tile only the flattened token axis (rows are independent).  Use the
    # largest tile up to block_m, but keep >= 2 grid steps so the "parallel"
    # axis can shard across both TensorCores on v7x.
    tm = min(block_m, max(8, _round_up(pl.cdiv(M, 2), 8)))
    tm = min(tm, _round_up(M, 8))
    grid = (pl.cdiv(M, tm),)

    x2d = x.reshape(M, E).astype(cdt)    # bf16 activations: half the streamed HBM bytes

    cparams = pltpu.CompilerParams(
        dimension_semantics=("parallel",),
        vmem_limit_bytes=_vmem_limit_bytes(),
    )

    kernel1 = _make_qkv_attn_kernel(H, Dh, A_pad, cdt, return_attn)

    if return_attn:
        out_shape1 = (jax.ShapeDtypeStruct((M, E), cdt),            # ctx stays bf16
                      jax.ShapeDtypeStruct((M, A_pad), x.dtype))
        out_specs1 = (pl.BlockSpec((tm, E), lambda i: (i, 0)),
                      pl.BlockSpec((tm, A_pad), lambda i: (i, 0)))
    else:
        out_shape1 = jax.ShapeDtypeStruct((M, E), cdt)
        out_specs1 = pl.BlockSpec((tm, E), lambda i: (i, 0))

    flops1 = int(2 * M * E * 3 * E       # QKV projection
                 + 2 * M * E * H * H     # score lane-sums
                 + 2 * M * A * A         # softmax denominator broadcast
                 + 2 * M * H * H * E     # attn lane-repeat
                 + 2 * M * E * E)        # context lane-sums
    bytes1 = int(2 * M * E                                        # x (bf16)
                 + 2 * (E * 3 * E + E * H + H * E + E * Dh + A * A)   # resident (bf16)
                 + 4 * 3 * E                                      # bias (f32)
                 + 2 * M * E                                      # ctx out (bf16)
                 + (4 * M * A_pad if return_attn else 0))         # attn out (f32)

    # Resident operands (constant index_map) are double-buffered by default;
    # on v7x they could be single-buffered via pipeline_mode=pl.Buffered(1)
    # once verified — left at the default here for lowering robustness.
    res1 = pl.pallas_call(
        kernel1,
        out_shape=out_shape1,
        grid=grid,
        in_specs=[
            pl.BlockSpec((tm, E), lambda i: (i, 0)),        # x: streamed over M
            pl.BlockSpec((E, 3 * E), lambda i: (0, 0)),     # QKV weight: VMEM-resident
            pl.BlockSpec((1, 3 * E), lambda i: (0, 0)),     # QKV bias (q pre-scaled)
            pl.BlockSpec((E, H), lambda i: (0, 0)),         # key-head lane-sum matrix
            pl.BlockSpec((H, E), lambda i: (0, 0)),         # attn lane-repeat matrix
            pl.BlockSpec((E, Dh), lambda i: (0, 0)),        # ctx lane-sum matrix
            pl.BlockSpec((A, A), lambda i: (0, 0)),         # softmax block-diag ones
        ],
        out_specs=out_specs1,
        compiler_params=cparams,
        cost_estimate=pl.CostEstimate(
            flops=flops1, transcendentals=int(2 * M * A), bytes_accessed=bytes1),
    )(x2d, params["wqkv_t"], params["bqkv"], params["gsum"], params["rep"],
      params["dsum"], params["bsum"])

    if return_attn:
        ctx2d, attn_padded = res1
        attn = attn_padded[:, :A].reshape(B, L, H, H)
    else:
        ctx2d = res1
        attn = None

    # (attn @ v).transpose(1, 2).reshape(B, L, E) from the reference module.
    # TODO(synk): this head<->sequence interleave mixes sequence positions within
    # a batch element, so it stays as XLA layout glue between the two kernels
    # (kept in bf16 so the extra HBM round trip moves half the bytes).
    ctx = ctx2d.reshape(B, L, H, Dh).transpose(0, 2, 1, 3).reshape(M, E)

    out2d = pl.pallas_call(
        _proj_kernel,
        out_shape=jax.ShapeDtypeStruct((M, E), x.dtype),
        grid=grid,
        in_specs=[
            pl.BlockSpec((tm, E), lambda i: (i, 0)),        # ctx (bf16): streamed
            pl.BlockSpec((E, E), lambda i: (0, 0)),         # proj weight: resident
            pl.BlockSpec((1, E), lambda i: (0, 0)),         # proj bias: resident
        ],
        out_specs=pl.BlockSpec((tm, E), lambda i: (i, 0)),
        compiler_params=cparams,
        cost_estimate=pl.CostEstimate(
            flops=int(2 * M * E * E), transcendentals=0,
            bytes_accessed=int(2 * M * E + 2 * E * E + 4 * E + 4 * M * E)),
    )(ctx, params["wproj_t"], params["bproj"])

    return out2d.reshape(B, L, E), attn


if __name__ == "__main__":
    # Small shapes consistent with the module: batch=2, seq=8, embed_dim=32,
    # num_heads=8 (module default) -> head_dim=4; qkv_bias=False (default).
    B, L, E, H = 2, 8, 32, 8
    Dh = E // H

    key = jax.random.PRNGKey(0)
    kx, kq, kp, kb = jax.random.split(key, 4)
    x = jax.random.normal(kx, (B, L, E), dtype=jnp.float32)
    w_qkv = jax.random.normal(kq, (3 * E, E), dtype=jnp.float32) * 0.05
    w_proj = jax.random.normal(kp, (E, E), dtype=jnp.float32) * 0.05
    b_proj = jax.random.normal(kb, (E,), dtype=jnp.float32) * 0.05

    params = prepare_self_attention_params(w_qkv, None, w_proj, b_proj, num_heads=H)
    out, attn = self_attention(x, params)
    out = jax.block_until_ready(out)
    attn = jax.block_until_ready(attn)

    # Pure-JAX f32 reference mirroring the PyTorch forward exactly.
    scale = Dh ** -0.5
    qkv = x @ w_qkv.T
    qkv = qkv.reshape(B, L, 3, E).transpose(2, 0, 1, 3).reshape(3, B, L, H, Dh)
    q, k, v = qkv[0], qkv[1], qkv[2]
    ref_attn = jax.nn.softmax(jnp.einsum("blhd,blgd->blhg", q, k) * scale, axis=-1)
    ref_ctx = jnp.einsum("blhg,blgd->blhd", ref_attn, v)
    ref_ctx = ref_ctx.transpose(0, 2, 1, 3).reshape(B, L, E)
    ref_out = ref_ctx @ w_proj.T + b_proj

    assert out.shape == (B, L, E), out.shape
    assert attn.shape == (B, L, H, H), attn.shape
    # bf16 MXU operands + approx-reciprocal softmax => loosened tolerances
    # (per the perf review); observed error is well inside these bounds.
    assert jnp.allclose(attn, ref_attn, atol=2e-2, rtol=2e-2), "attn mismatch vs reference"
    assert jnp.allclose(out, ref_out, atol=2e-2, rtol=2e-2), "output mismatch vs reference"
    print("KERNEL_OK")
</pallas_src>

<mosaic_0001>
module attributes {stable_mosaic.version = 11 : i64} {
  func.func @kernel(%arg0: i32, %arg1: memref<8x32xbf16, #tpu.memory_space<vmem>>, %arg2: memref<32x96xbf16, #tpu.memory_space<vmem>>, %arg3: memref<1x96xf32, #tpu.memory_space<vmem>>, %arg4: memref<32x8xbf16, #tpu.memory_space<vmem>>, %arg5: memref<8x32xbf16, #tpu.memory_space<vmem>>, %arg6: memref<32x4xbf16, #tpu.memory_space<vmem>>, %arg7: memref<64x64xbf16, #tpu.memory_space<vmem>>, %arg8: memref<8x32xbf16, #tpu.memory_space<vmem>>, %arg9: memref<8x128xf32, #tpu.memory_space<vmem>>) attributes {dimension_semantics = [#tpu.dimension_semantics<parallel>], iteration_bounds = array<i64: 2>, scalar_prefetch = 0 : i64, scratch_operands = 0 : i64, tpu.core_type = #tpu.core_type<tc>, window_params = [{transform_indices = @transform_0, window_bounds = array<i64: 8, 32>}, {pipeline_mode = #tpu.pipeline_mode<synchronous>, transform_indices = @transform_1, window_bounds = array<i64: 32, 96>}, {pipeline_mode = #tpu.pipeline_mode<synchronous>, transform_indices = @transform_2, window_bounds = array<i64: 1, 96>}, {pipeline_mode = #tpu.pipeline_mode<synchronous>, transform_indices = @transform_3, window_bounds = array<i64: 32, 8>}, {pipeline_mode = #tpu.pipeline_mode<synchronous>, transform_indices = @transform_4, window_bounds = array<i64: 8, 32>}, {pipeline_mode = #tpu.pipeline_mode<synchronous>, transform_indices = @transform_5, window_bounds = array<i64: 32, 4>}, {pipeline_mode = #tpu.pipeline_mode<synchronous>, transform_indices = @transform_6, window_bounds = array<i64: 64, 64>}, {transform_indices = @transform_7, window_bounds = array<i64: 8, 32>}, {transform_indices = @transform_8, window_bounds = array<i64: 8, 128>}]} {
    %c0 = arith.constant 0 : index
    %c0_0 = arith.constant 0 : index
    %0 = vector.load %arg1[%c0, %c0_0] : memref<8x32xbf16, #tpu.memory_space<vmem>>, vector<8x32xbf16>
    %c0_1 = arith.constant 0 : index
    %c0_2 = arith.constant 0 : index
    %1 = vector.load %arg2[%c0_1, %c0_2] : memref<32x96xbf16, #tpu.memory_space<vmem>>, vector<32x96xbf16>
    %cst = arith.constant dense<0.000000e+00> : vector<8x96xf32>
    %2 = tpu.matmul %0, %1, %cst {dimension_numbers = #tpu.dot_dimension_numbers<[1], [0], [0], [1], [0, 0, 1, 1], [], []>} : vector<8x32xbf16>, vector<32x96xbf16>, vector<8x96xf32> -> vector<8x96xf32>
    %c0_3 = arith.constant 0 : index
    %c0_4 = arith.constant 0 : index
    %3 = vector.load %arg3[%c0_3, %c0_4] : memref<1x96xf32, #tpu.memory_space<vmem>>, vector<1x96xf32>
    %4 = vector.broadcast %3 : vector<1x96xf32> to vector<8x96xf32>
    %5 = arith.addf %2, %4 : vector<8x96xf32>
    %6 = vector.extract_strided_slice %5 {offsets = [0, 0], sizes = [8, 32], strides = [1, 1]} : vector<8x96xf32> to vector<8x32xf32>
    %7 = vector.extract_strided_slice %5 {offsets = [0, 32], sizes = [8, 32], strides = [1, 1]} : vector<8x96xf32> to vector<8x32xf32>
    %8 = vector.extract_strided_slice %5 {offsets = [0, 64], sizes = [8, 32], strides = [1, 1]} : vector<8x96xf32> to vector<8x32xf32>
    %9 = vector.extract_strided_slice %6 {offsets = [0, 0], sizes = [8, 4], strides = [1, 1]} : vector<8x32xf32> to vector<8x4xf32>
    %10 = tpu.concatenate %9, %9, %9, %9, %9, %9, %9, %9 in 1 : vector<8x4xf32>, vector<8x4xf32>, vector<8x4xf32>, vector<8x4xf32>, vector<8x4xf32>, vector<8x4xf32>, vector<8x4xf32>, vector<8x4xf32> -> vector<8x32xf32>
    %11 = arith.mulf %10, %7 : vector<8x32xf32>
    %12 = arith.truncf %11 : vector<8x32xf32> to vector<8x32xbf16>
    %c0_5 = arith.constant 0 : index
    %c0_6 = arith.constant 0 : index
    %13 = vector.load %arg4[%c0_5, %c0_6] : memref<32x8xbf16, #tpu.memory_space<vmem>>, vector<32x8xbf16>
    %cst_7 = arith.constant dense<0.000000e+00> : vector<8x8xf32>
    %14 = tpu.matmul %12, %13, %cst_7 {dimension_numbers = #tpu.dot_dimension_numbers<[1], [0], [0], [1], [0, 0, 1, 1], [], []>} : vector<8x32xbf16>, vector<32x8xbf16>, vector<8x8xf32> -> vector<8x8xf32>
    %15 = vector.extract_strided_slice %6 {offsets = [0, 4], sizes = [8, 4], strides = [1, 1]} : vector<8x32xf32> to vector<8x4xf32>
    %16 = tpu.concatenate %15, %15, %15, %15, %15, %15, %15, %15 in 1 : vector<8x4xf32>, vector<8x4xf32>, vector<8x4xf32>, vector<8x4xf32>, vector<8x4xf32>, vector<8x4xf32>, vector<8x4xf32>, vector<8x4xf32> -> vector<8x32xf32>
    %17 = arith.mulf %16, %7 : vector<8x32xf32>
    %18 = arith.truncf %17 : vector<8x32xf32> to vector<8x32xbf16>
    %c0_8 = arith.constant 0 : index
    %c0_9 = arith.constant 0 : index
    %19 = vector.load %arg4[%c0_8, %c0_9] : memref<32x8xbf16, #tpu.memory_space<vmem>>, vector<32x8xbf16>
    %cst_10 = arith.constant dense<0.000000e+00> : vector<8x8xf32>
    %20 = tpu.matmul %18, %19, %cst_10 {dimension_numbers = #tpu.dot_dimension_numbers<[1], [0], [0], [1], [0, 0, 1, 1], [], []>} : vector<8x32xbf16>, vector<32x8xbf16>, vector<8x8xf32> -> vector<8x8xf32>
    %21 = vector.extract_strided_slice %6 {offsets = [0, 8], sizes = [8, 4], strides = [1, 1]} : vector<8x32xf32> to vector<8x4xf32>
    %22 = tpu.concatenate %21, %21, %21, %21, %21, %21, %21, %21 in 1 : vector<8x4xf32>, vector<8x4xf32>, vector<8x4xf32>, vector<8x4xf32>, vector<8x4xf32>, vector<8x4xf32>, vector<8x4xf32>, vector<8x4xf32> -> vector<8x32xf32>
    %23 = arith.mulf %22, %7 : vector<8x32xf32>
    %24 = arith.truncf %23 : vector<8x32xf32> to vector<8x32xbf16>
    %c0_11 = arith.constant 0 : index
    %c0_12 = arith.constant 0 : index
    %25 = vector.load %arg4[%c0_11, %c0_12] : memref<32x8xbf16, #tpu.memory_space<vmem>>, vector<32x8xbf16>
    %cst_13 = arith.constant dense<0.000000e+00> : vector<8x8xf32>
    %26 = tpu.matmul %24, %25, %cst_13 {dimension_numbers = #tpu.dot_dimension_numbers<[1], [0], [0], [1], [0, 0, 1, 1], [], []>} : vector<8x32xbf16>, vector<32x8xbf16>, vector<8x8xf32> -> vector<8x8xf32>
    %27 = vector.extract_strided_slice %6 {offsets = [0, 12], sizes = [8, 4], strides = [1, 1]} : vector<8x32xf32> to vector<8x4xf32>
    %28 = tpu.concatenate %27, %27, %27, %27, %27, %27, %27, %27 in 1 : vector<8x4xf32>, vector<8x4xf32>, vector<8x4xf32>, vector<8x4xf32>, vector<8x4xf32>, vector<8x4xf32>, vector<8x4xf32>, vector<8x4xf32> -> vector<8x32xf32>
    %29 = arith.mulf %28, %7 : vector<8x32xf32>
    %30 = arith.truncf %29 : vector<8x32xf32> to vector<8x32xbf16>
    %c0_14 = arith.constant 0 : index
    %c0_15 = arith.constant 0 : index
    %31 = vector.load %arg4[%c0_14, %c0_15] : memref<32x8xbf16, #tpu.memory_space<vmem>>, vector<32x8xbf16>
    %cst_16 = arith.constant dense<0.000000e+00> : vector<8x8xf32>
    %32 = tpu.matmul %30, %31, %cst_16 {dimension_numbers = #tpu.dot_dimension_numbers<[1], [0], [0], [1], [0, 0, 1, 1], [], []>} : vector<8x32xbf16>, vector<32x8xbf16>, vector<8x8xf32> -> vector<8x8xf32>
    %33 = vector.extract_strided_slice %6 {offsets = [0, 16], sizes = [8, 4], strides = [1, 1]} : vector<8x32xf32> to vector<8x4xf32>
    %34 = tpu.concatenate %33, %33, %33, %33, %33, %33, %33, %33 in 1 : vector<8x4xf32>, vector<8x4xf32>, vector<8x4xf32>, vector<8x4xf32>, vector<8x4xf32>, vector<8x4xf32>, vector<8x4xf32>, vector<8x4xf32> -> vector<8x32xf32>
    %35 = arith.mulf %34, %7 : vector<8x32xf32>
    %36 = arith.truncf %35 : vector<8x32xf32> to vector<8x32xbf16>
    %c0_17 = arith.constant 0 : index
    %c0_18 = arith.constant 0 : index
    %37 = vector.load %arg4[%c0_17, %c0_18] : memref<32x8xbf16, #tpu.memory_space<vmem>>, vector<32x8xbf16>
    %cst_19 = arith.constant dense<0.000000e+00> : vector<8x8xf32>
    %38 = tpu.matmul %36, %37, %cst_19 {dimension_numbers = #tpu.dot_dimension_numbers<[1], [0], [0], [1], [0, 0, 1, 1], [], []>} : vector<8x32xbf16>, vector<32x8xbf16>, vector<8x8xf32> -> vector<8x8xf32>
    %39 = vector.extract_strided_slice %6 {offsets = [0, 20], sizes = [8, 4], strides = [1, 1]} : vector<8x32xf32> to vector<8x4xf32>
    %40 = tpu.concatenate %39, %39, %39, %39, %39, %39, %39, %39 in 1 : vector<8x4xf32>, vector<8x4xf32>, vector<8x4xf32>, vector<8x4xf32>, vector<8x4xf32>, vector<8x4xf32>, vector<8x4xf32>, vector<8x4xf32> -> vector<8x32xf32>
    %41 = arith.mulf %40, %7 : vector<8x32xf32>
    %42 = arith.truncf %41 : vector<8x32xf32> to vector<8x32xbf16>
    %c0_20 = arith.constant 0 : index
    %c0_21 = arith.constant 0 : index
    %43 = vector.load %arg4[%c0_20, %c0_21] : memref<32x8xbf16, #tpu.memory_space<vmem>>, vector<32x8xbf16>
    %cst_22 = arith.constant dense<0.000000e+00> : vector<8x8xf32>
    %44 = tpu.matmul %42, %43, %cst_22 {dimension_numbers = #tpu.dot_dimension_numbers<[1], [0], [0], [1], [0, 0, 1, 1], [], []>} : vector<8x32xbf16>, vector<32x8xbf16>, vector<8x8xf32> -> vector<8x8xf32>
    %45 = vector.extract_strided_slice %6 {offsets = [0, 24], sizes = [8, 4], strides = [1, 1]} : vector<8x32xf32> to vector<8x4xf32>
    %46 = tpu.concatenate %45, %45, %45, %45, %45, %45, %45, %45 in 1 : vector<8x4xf32>, vector<8x4xf32>, vector<8x4xf32>, vector<8x4xf32>, vector<8x4xf32>, vector<8x4xf32>, vector<8x4xf32>, vector<8x4xf32> -> vector<8x32xf32>
    %47 = arith.mulf %46, %7 : vector<8x32xf32>
    %48 = arith.truncf %47 : vector<8x32xf32> to vector<8x32xbf16>
    %c0_23 = arith.constant 0 : index
    %c0_24 = arith.constant 0 : index
    %49 = vector.load %arg4[%c0_23, %c0_24] : memref<32x8xbf16, #tpu.memory_space<vmem>>, vector<32x8xbf16>
    %cst_25 = arith.constant dense<0.000000e+00> : vector<8x8xf32>
    %50 = tpu.matmul %48, %49, %cst_25 {dimension_numbers = #tpu.dot_dimension_numbers<[1], [0], [0], [1], [0, 0, 1, 1], [], []>} : vector<8x32xbf16>, vector<32x8xbf16>, vector<8x8xf32> -> vector<8x8xf32>
    %51 = vector.extract_strided_slice %6 {offsets = [0, 28], sizes = [8, 4], strides = [1, 1]} : vector<8x32xf32> to vector<8x4xf32>
    %52 = tpu.concatenate %51, %51, %51, %51, %51, %51, %51, %51 in 1 : vector<8x4xf32>, vector<8x4xf32>, vector<8x4xf32>, vector<8x4xf32>, vector<8x4xf32>, vector<8x4xf32>, vector<8x4xf32>, vector<8x4xf32> -> vector<8x32xf32>
    %53 = arith.mulf %52, %7 : vector<8x32xf32>
    %54 = arith.truncf %53 : vector<8x32xf32> to vector<8x32xbf16>
    %c0_26 = arith.constant 0 : index
    %c0_27 = arith.constant 0 : index
    %55 = vector.load %arg4[%c0_26, %c0_27] : memref<32x8xbf16, #tpu.memory_space<vmem>>, vector<32x8xbf16>
    %cst_28 = arith.constant dense<0.000000e+00> : vector<8x8xf32>
    %56 = tpu.matmul %54, %55, %cst_28 {dimension_numbers = #tpu.dot_dimension_numbers<[1], [0], [0], [1], [0, 0, 1, 1], [], []>} : vector<8x32xbf16>, vector<32x8xbf16>, vector<8x8xf32> -> vector<8x8xf32>
    %57 = tpu.concatenate %14, %20, %26, %32, %38, %44, %50, %56 in 1 : vector<8x8xf32>, vector<8x8xf32>, vector<8x8xf32>, vector<8x8xf32>, vector<8x8xf32>, vector<8x8xf32>, vector<8x8xf32>, vector<8x8xf32> -> vector<8x64xf32>
    %cst_29 = arith.constant dense<0xFF800000> : vector<8xf32>
    %58 = vector.multi_reduction <maximumf>, %57, %cst_29 [1] : vector<8x64xf32> to vector<8xf32>
    %59 = vector.shape_cast %58 : vector<8xf32> to vector<8x1xf32>
    %60 = vector.broadcast %59 : vector<8x1xf32> to vector<8x64xf32>
    %61 = arith.subf %57, %60 : vector<8x64xf32>
    %62 = math.exp %61 : vector<8x64xf32>
    %63 = arith.truncf %62 : vector<8x64xf32> to vector<8x64xbf16>
    %c0_30 = arith.constant 0 : index
    %c0_31 = arith.constant 0 : index
    %64 = vector.load %arg7[%c0_30, %c0_31] : memref<64x64xbf16, #tpu.memory_space<vmem>>, vector<64x64xbf16>
    %cst_32 = arith.constant dense<0.000000e+00> : vector<8x64xf32>
    %65 = tpu.matmul %63, %64, %cst_32 {dimension_numbers = #tpu.dot_dimension_numbers<[1], [0], [0], [1], [0, 0, 1, 1], [], []>} : vector<8x64xbf16>, vector<64x64xbf16>, vector<8x64xf32> -> vector<8x64xf32>
    %66 = tpu.reciprocal %65 {approx = true} : vector<8x64xf32> -> vector<8x64xf32>
    %67 = arith.mulf %62, %66 : vector<8x64xf32>
    %cst_33 = arith.constant 0.000000e+00 : f32
    %68 = vector.broadcast %cst_33 : f32 to vector<8x64xf32>
    %69 = tpu.concatenate %67, %68 in 1 : vector<8x64xf32>, vector<8x64xf32> -> vector<8x128xf32>
    %c0_34 = arith.constant 0 : index
    %c0_35 = arith.constant 0 : index
    %70 = vector.load %arg9[%c0_34, %c0_35] : memref<8x128xf32, #tpu.memory_space<vmem>>, vector<8x128xf32>
    tpu.vector_store %arg9[%c0_34, %c0_35], %69 {strides = array<i32>} : memref<8x128xf32, #tpu.memory_space<vmem>>, vector<8x128xf32>,
    %71 = vector.extract_strided_slice %67 {offsets = [0, 0], sizes = [8, 8], strides = [1, 1]} : vector<8x64xf32> to vector<8x8xf32>
    %72 = arith.truncf %71 : vector<8x8xf32> to vector<8x8xbf16>
    %c0_36 = arith.constant 0 : index
    %c0_37 = arith.constant 0 : index
    %73 = vector.load %arg5[%c0_36, %c0_37] : memref<8x32xbf16, #tpu.memory_space<vmem>>, vector<8x32xbf16>
    %cst_38 = arith.constant dense<0.000000e+00> : vector<8x32xf32>
    %74 = tpu.matmul %72, %73, %cst_38 {dimension_numbers = #tpu.dot_dimension_numbers<[1], [0], [0], [1], [0, 0, 1, 1], [], []>} : vector<8x8xbf16>, vector<8x32xbf16>, vector<8x32xf32> -> vector<8x32xf32>
    %75 = arith.mulf %74, %8 : vector<8x32xf32>
    %76 = arith.truncf %75 : vector<8x32xf32> to vector<8x32xbf16>
    %c0_39 = arith.constant 0 : index
    %c0_40 = arith.constant 0 : index
    %77 = vector.load %arg6[%c0_39, %c0_40] : memref<32x4xbf16, #tpu.memory_space<vmem>>, vector<32x4xbf16>
    %cst_41 = arith.constant dense<0.000000e+00> : vector<8x4xf32>
    %78 = tpu.matmul %76, %77, %cst_41 {dimension_numbers = #tpu.dot_dimension_numbers<[1], [0], [0], [1], [0, 0, 1, 1], [], []>} : vector<8x32xbf16>, vector<32x4xbf16>, vector<8x4xf32> -> vector<8x4xf32>
    %79 = vector.extract_strided_slice %67 {offsets = [0, 8], sizes = [8, 8], strides = [1, 1]} : vector<8x64xf32> to vector<8x8xf32>
    %80 = arith.truncf %79 : vector<8x8xf32> to vector<8x8xbf16>
    %c0_42 = arith.constant 0 : index
    %c0_43 = arith.constant 0 : index
    %81 = vector.load %arg5[%c0_42, %c0_43] : memref<8x32xbf16, #tpu.memory_space<vmem>>, vector<8x32xbf16>
    %cst_44 = arith.constant dense<0.000000e+00> : vector<8x32xf32>
    %82 = tpu.matmul %80, %81, %cst_44 {dimension_numbers = #tpu.dot_dimension_numbers<[1], [0], [0], [1], [0, 0, 1, 1], [], []>} : vector<8x8xbf16>, vector<8x32xbf16>, vector<8x32xf32> -> vector<8x32xf32>
    %83 = arith.mulf %82, %8 : vector<8x32xf32>
    %84 = arith.truncf %83 : vector<8x32xf32> to vector<8x32xbf16>
    %c0_45 = arith.constant 0 : index
    %c0_46 = arith.constant 0 : index
    %85 = vector.load %arg6[%c0_45, %c0_46] : memref<32x4xbf16, #tpu.memory_space<vmem>>, vector<32x4xbf16>
    %cst_47 = arith.constant dense<0.000000e+00> : vector<8x4xf32>
    %86 = tpu.matmul %84, %85, %cst_47 {dimension_numbers = #tpu.dot_dimension_numbers<[1], [0], [0], [1], [0, 0, 1, 1], [], []>} : vector<8x32xbf16>, vector<32x4xbf16>, vector<8x4xf32> -> vector<8x4xf32>
    %87 = vector.extract_strided_slice %67 {offsets = [0, 16], sizes = [8, 8], strides = [1, 1]} : vector<8x64xf32> to vector<8x8xf32>
    %88 = arith.truncf %87 : vector<8x8xf32> to vector<8x8xbf16>
    %c0_48 = arith.constant 0 : index
    %c0_49 = arith.constant 0 : index
    %89 = vector.load %arg5[%c0_48, %c0_49] : memref<8x32xbf16, #tpu.memory_space<vmem>>, vector<8x32xbf16>
    %cst_50 = arith.constant dense<0.000000e+00> : vector<8x32xf32>
    %90 = tpu.matmul %88, %89, %cst_50 {dimension_numbers = #tpu.dot_dimension_numbers<[1], [0], [0], [1], [0, 0, 1, 1], [], []>} : vector<8x8xbf16>, vector<8x32xbf16>, vector<8x32xf32> -> vector<8x32xf32>
    %91 = arith.mulf %90, %8 : vector<8x32xf32>
    %92 = arith.truncf %91 : vector<8x32xf32> to vector<8x32xbf16>
    %c0_51 = arith.constant 0 : index
    %c0_52 = arith.constant 0 : index
    %93 = vector.load %arg6[%c0_51, %c0_52] : memref<32x4xbf16, #tpu.memory_space<vmem>>, vector<32x4xbf16>
    %cst_53 = arith.constant dense<0.000000e+00> : vector<8x4xf32>
    %94 = tpu.matmul %92, %93, %cst_53 {dimension_numbers = #tpu.dot_dimension_numbers<[1], [0], [0], [1], [0, 0, 1, 1], [], []>} : vector<8x32xbf16>, vector<32x4xbf16>, vector<8x4xf32> -> vector<8x4xf32>
    %95 = vector.extract_strided_slice %67 {offsets = [0, 24], sizes = [8, 8], strides = [1, 1]} : vector<8x64xf32> to vector<8x8xf32>
    %96 = arith.truncf %95 : vector<8x8xf32> to vector<8x8xbf16>
    %c0_54 = arith.constant 0 : index
    %c0_55 = arith.constant 0 : index
    %97 = vector.load %arg5[%c0_54, %c0_55] : memref<8x32xbf16, #tpu.memory_space<vmem>>, vector<8x32xbf16>
    %cst_56 = arith.constant dense<0.000000e+00> : vector<8x32xf32>
    %98 = tpu.matmul %96, %97, %cst_56 {dimension_numbers = #tpu.dot_dimension_numbers<[1], [0], [0], [1], [0, 0, 1, 1], [], []>} : vector<8x8xbf16>, vector<8x32xbf16>, vector<8x32xf32> -> vector<8x32xf32>
    %99 = arith.mulf %98, %8 : vector<8x32xf32>
    %100 = arith.truncf %99 : vector<8x32xf32> to vector<8x32xbf16>
    %c0_57 = arith.constant 0 : index
    %c0_58 = arith.constant 0 : index
    %101 = vector.load %arg6[%c0_57, %c0_58] : memref<32x4xbf16, #tpu.memory_space<vmem>>, vector<32x4xbf16>
    %cst_59 = arith.constant dense<0.000000e+00> : vector<8x4xf32>
    %102 = tpu.matmul %100, %101, %cst_59 {dimension_numbers = #tpu.dot_dimension_numbers<[1], [0], [0], [1], [0, 0, 1, 1], [], []>} : vector<8x32xbf16>, vector<32x4xbf16>, vector<8x4xf32> -> vector<8x4xf32>
    %103 = vector.extract_strided_slice %67 {offsets = [0, 32], sizes = [8, 8], strides = [1, 1]} : vector<8x64xf32> to vector<8x8xf32>
    %104 = arith.truncf %103 : vector<8x8xf32> to vector<8x8xbf16>
    %c0_60 = arith.constant 0 : index
    %c0_61 = arith.constant 0 : index
    %105 = vector.load %arg5[%c0_60, %c0_61] : memref<8x32xbf16, #tpu.memory_space<vmem>>, vector<8x32xbf16>
    %cst_62 = arith.constant dense<0.000000e+00> : vector<8x32xf32>
    %106 = tpu.matmul %104, %105, %cst_62 {dimension_numbers = #tpu.dot_dimension_numbers<[1], [0], [0], [1], [0, 0, 1, 1], [], []>} : vector<8x8xbf16>, vector<8x32xbf16>, vector<8x32xf32> -> vector<8x32xf32>
    %107 = arith.mulf %106, %8 : vector<8x32xf32>
    %108 = arith.truncf %107 : vector<8x32xf32> to vector<8x32xbf16>
    %c0_63 = arith.constant 0 : index
    %c0_64 = arith.constant 0 : index
    %109 = vector.load %arg6[%c0_63, %c0_64] : memref<32x4xbf16, #tpu.memory_space<vmem>>, vector<32x4xbf16>
    %cst_65 = arith.constant dense<0.000000e+00> : vector<8x4xf32>
    %110 = tpu.matmul %108, %109, %cst_65 {dimension_numbers = #tpu.dot_dimension_numbers<[1], [0], [0], [1], [0, 0, 1, 1], [], []>} : vector<8x32xbf16>, vector<32x4xbf16>, vector<8x4xf32> -> vector<8x4xf32>
    %111 = vector.extract_strided_slice %67 {offsets = [0, 40], sizes = [8, 8], strides = [1, 1]} : vector<8x64xf32> to vector<8x8xf32>
    %112 = arith.truncf %111 : vector<8x8xf32> to vector<8x8xbf16>
    %c0_66 = arith.constant 0 : index
    %c0_67 = arith.constant 0 : index
    %113 = vector.load %arg5[%c0_66, %c0_67] : memref<8x32xbf16, #tpu.memory_space<vmem>>, vector<8x32xbf16>
    %cst_68 = arith.constant dense<0.000000e+00> : vector<8x32xf32>
    %114 = tpu.matmul %112, %113, %cst_68 {dimension_numbers = #tpu.dot_dimension_numbers<[1], [0], [0], [1], [0, 0, 1, 1], [], []>} : vector<8x8xbf16>, vector<8x32xbf16>, vector<8x32xf32> -> vector<8x32xf32>
    %115 = arith.mulf %114, %8 : vector<8x32xf32>
    %116 = arith.truncf %115 : vector<8x32xf32> to vector<8x32xbf16>
    %c0_69 = arith.constant 0 : index
    %c0_70 = arith.constant 0 : index
    %117 = vector.load %arg6[%c0_69, %c0_70] : memref<32x4xbf16, #tpu.memory_space<vmem>>, vector<32x4xbf16>
    %cst_71 = arith.constant dense<0.000000e+00> : vector<8x4xf32>
    %118 = tpu.matmul %116, %117, %cst_71 {dimension_numbers = #tpu.dot_dimension_numbers<[1], [0], [0], [1], [0, 0, 1, 1], [], []>} : vector<8x32xbf16>, vector<32x4xbf16>, vector<8x4xf32> -> vector<8x4xf32>
    %119 = vector.extract_strided_slice %67 {offsets = [0, 48], sizes = [8, 8], strides = [1, 1]} : vector<8x64xf32> to vector<8x8xf32>
    %120 = arith.truncf %119 : vector<8x8xf32> to vector<8x8xbf16>
    %c0_72 = arith.constant 0 : index
    %c0_73 = arith.constant 0 : index
    %121 = vector.load %arg5[%c0_72, %c0_73] : memref<8x32xbf16, #tpu.memory_space<vmem>>, vector<8x32xbf16>
    %cst_74 = arith.constant dense<0.000000e+00> : vector<8x32xf32>
    %122 = tpu.matmul %120, %121, %cst_74 {dimension_numbers = #tpu.dot_dimension_numbers<[1], [0], [0], [1], [0, 0, 1, 1], [], []>} : vector<8x8xbf16>, vector<8x32xbf16>, vector<8x32xf32> -> vector<8x32xf32>
    %123 = arith.mulf %122, %8 : vector<8x32xf32>
    %124 = arith.truncf %123 : vector<8x32xf32> to vector<8x32xbf16>
    %c0_75 = arith.constant 0 : index
    %c0_76 = arith.constant 0 : index
    %125 = vector.load %arg6[%c0_75, %c0_76] : memref<32x4xbf16, #tpu.memory_space<vmem>>, vector<32x4xbf16>
    %cst_77 = arith.constant dense<0.000000e+00> : vector<8x4xf32>
    %126 = tpu.matmul %124, %125, %cst_77 {dimension_numbers = #tpu.dot_dimension_numbers<[1], [0], [0], [1], [0, 0, 1, 1], [], []>} : vector<8x32xbf16>, vector<32x4xbf16>, vector<8x4xf32> -> vector<8x4xf32>
    %127 = vector.extract_strided_slice %67 {offsets = [0, 56], sizes = [8, 8], strides = [1, 1]} : vector<8x64xf32> to vector<8x8xf32>
    %128 = arith.truncf %127 : vector<8x8xf32> to vector<8x8xbf16>
    %c0_78 = arith.constant 0 : index
    %c0_79 = arith.constant 0 : index
    %129 = vector.load %arg5[%c0_78, %c0_79] : memref<8x32xbf16, #tpu.memory_space<vmem>>, vector<8x32xbf16>
    %cst_80 = arith.constant dense<0.000000e+00> : vector<8x32xf32>
    %130 = tpu.matmul %128, %129, %cst_80 {dimension_numbers = #tpu.dot_dimension_numbers<[1], [0], [0], [1], [0, 0, 1, 1], [], []>} : vector<8x8xbf16>, vector<8x32xbf16>, vector<8x32xf32> -> vector<8x32xf32>
    %131 = arith.mulf %130, %8 : vector<8x32xf32>
    %132 = arith.truncf %131 : vector<8x32xf32> to vector<8x32xbf16>
    %c0_81 = arith.constant 0 : index
    %c0_82 = arith.constant 0 : index
    %133 = vector.load %arg6[%c0_81, %c0_82] : memref<32x4xbf16, #tpu.memory_space<vmem>>, vector<32x4xbf16>
    %cst_83 = arith.constant dense<0.000000e+00> : vector<8x4xf32>
    %134 = tpu.matmul %132, %133, %cst_83 {dimension_numbers = #tpu.dot_dimension_numbers<[1], [0], [0], [1], [0, 0, 1, 1], [], []>} : vector<8x32xbf16>, vector<32x4xbf16>, vector<8x4xf32> -> vector<8x4xf32>
    %135 = tpu.concatenate %78, %86, %94, %102, %110, %118, %126, %134 in 1 : vector<8x4xf32>, vector<8x4xf32>, vector<8x4xf32>, vector<8x4xf32>, vector<8x4xf32>, vector<8x4xf32>, vector<8x4xf32>, vector<8x4xf32> -> vector<8x32xf32>
    %136 = arith.truncf %135 : vector<8x32xf32> to vector<8x32xbf16>
    %c0_84 = arith.constant 0 : index
    %c0_85 = arith.constant 0 : index
    %137 = vector.load %arg8[%c0_84, %c0_85] : memref<8x32xbf16, #tpu.memory_space<vmem>>, vector<8x32xbf16>
    tpu.vector_store %arg8[%c0_84, %c0_85], %136 {strides = array<i32>} : memref<8x32xbf16, #tpu.memory_space<vmem>>, vector<8x32xbf16>,
    return
  }
  func.func @transform_0(%arg0: i32) -> (i32, i32) {
    %c0_i32 = arith.constant 0 : i32
    %c0_i32_0 = arith.constant 0 : i32
    return %arg0, %c0_i32 : i32, i32
  }
  func.func @transform_1(%arg0: i32) -> (i32, i32) {
    %c0_i32 = arith.constant 0 : i32
    %c0_i32_0 = arith.constant 0 : i32
    %c0_i32_1 = arith.constant 0 : i32
    return %c0_i32, %c0_i32_0 : i32, i32
  }
  func.func @transform_2(%arg0: i32) -> (i32, i32) {
    %c0_i32 = arith.constant 0 : i32
    %c0_i32_0 = arith.constant 0 : i32
    %c0_i32_1 = arith.constant 0 : i32
    return %c0_i32, %c0_i32_0 : i32, i32
  }
  func.func @transform_3(%arg0: i32) -> (i32, i32) {
    %c0_i32 = arith.constant 0 : i32
    %c0_i32_0 = arith.constant 0 : i32
    %c0_i32_1 = arith.constant 0 : i32
    return %c0_i32, %c0_i32_0 : i32, i32
  }
  func.func @transform_4(%arg0: i32) -> (i32, i32) {
    %c0_i32 = arith.constant 0 : i32
    %c0_i32_0 = arith.constant 0 : i32
    %c0_i32_1 = arith.constant 0 : i32
    return %c0_i32, %c0_i32_0 : i32, i32
  }
  func.func @transform_5(%arg0: i32) -> (i32, i32) {
    %c0_i32 = arith.constant 0 : i32
    %c0_i32_0 = arith.constant 0 : i32
    %c0_i32_1 = arith.constant 0 : i32
    return %c0_i32, %c0_i32_0 : i32, i32
  }
  func.func @transform_6(%arg0: i32) -> (i32, i32) {
    %c0_i32 = arith.constant 0 : i32
    %c0_i32_0 = arith.constant 0 : i32
    %c0_i32_1 = arith.constant 0 : i32
    return %c0_i32, %c0_i32_0 : i32, i32
  }
  func.func @transform_7(%arg0: i32) -> (i32, i32) {
    %c0_i32 = arith.constant 0 : i32
    %c0_i32_0 = arith.constant 0 : i32
    return %arg0, %c0_i32 : i32, i32
  }
  func.func @transform_8(%arg0: i32) -> (i32, i32) {
    %c0_i32 = arith.constant 0 : i32
    %c0_i32_0 = arith.constant 0 : i32
    return %arg0, %c0_i32 : i32, i32
  }
}

</mosaic_0001>

<llo_original>
// kernel: tpu_custom_call.1
$region0: #{tpu_custom_call.1}
  #allocation0 [shape = 'u32[]', space=smem, size = 0x4, offset = 0x4, fixed_abs, tag = 'smem constant byte address 0x4 - core index']
  #allocation1 [shape = 'u32[144,128]{1,0:T(1,128)}', space=vmem, size = 0x12000, scoped, tag = 'internal scratch']
  %s0 = inlined_call_operand.vmem [shape: bf16[16,32], index: 0, kind: input, shape index: {}]
  %s1 = inlined_call_operand.vmem [shape: bf16[32,96], index: 1, kind: input, shape index: {}]
  %s2 = inlined_call_operand.hbm [shape: f32[1,96], index: 2, kind: input, shape index: {}]
  %s3 = inlined_call_operand.vmem [shape: bf16[32,8], index: 3, kind: input, shape index: {}]
  %s4 = inlined_call_operand.vmem [shape: bf16[8,32], index: 4, kind: input, shape index: {}]
  %s5 = inlined_call_operand.vmem [shape: bf16[32,4], index: 5, kind: input, shape index: {}]
  %s6 = inlined_call_operand.vmem [shape: bf16[64,64], index: 6, kind: input, shape index: {}]
  %s7 = inlined_call_operand.hbm [shape: bf16[16,32], index: 7, kind: output, shape index: {0}]
  %s8 = inlined_call_operand.hbm [shape: f32[16,128], index: 8, kind: output, shape index: {1}]
  %9 = xla_tuple %s7, %s8
  %s10 = sld [smem:[#allocation0]]
  $region73: #{tpu_custom_call.1} parent=0
    _
  %s12 = ssub.s32 1, %s10
  %s13 = scalar_select 0, %s12, %s10
  $region1: #{tpu_custom_call.1} parent=0
    #allocation2 [shape = 'u8[512]{0}', space=vmem, size = 0x400, scoped, tag = 'input window, operand 2, single buffered']
    #allocation3 [shape = 's32[2]{0}', space=sflag, size = 0x8, scoped, tag = 'scoped memory for tpu_custom_call.1']
    #allocation4 [shape = 's32[2]{0}', space=sflag, size = 0x8, scoped, tag = 'scoped memory for tpu_custom_call.1']
    #allocation5 [shape = 'u8[4096]{0}', space=vmem, size = 0x1000, scoped, tag = 'output window, operand 0']
    #allocation6 [shape = 'u8[8192]{0}', space=vmem, size = 0x2000, scoped, tag = 'output window, operand 1']
    #allocation7 [shape = 's32[2]{0}', space=sflag, size = 0x8, scoped, tag = 'scoped memory for tpu_custom_call.1']
    %14 = vsyncpa [#allocation3], 0
    %15 = vsyncpa [#allocation4], 0
    %s16 = scalar_lea.sflag [#allocation4], 1
    %17 = vsyncpa %s16, 0
    %18 = vsyncpa [#allocation7], 0
    %s19 = scalar_lea.sflag [#allocation7], 1
    %20 = vsyncpa %s19, 0
    loop: start=0, step=1, limit=4
    $region2: #{tpu_custom_call.1} parent=1 // loop_pre_header
      _
    $region3: #{tpu_custom_call.1} parent=1 // loop_header
      %s22 = sphi 0, %s26
      %p23 = scmp.ge.s32.totalorder %s22, 4
      %s32 = sphi 0, %s34
      %s35 = sphi 0, %s32
      %s36 = sphi 0, %s35
      %s52 = sphi 0, %s36
      %s56 = sphi 0, %s56
      %s58 = sphi 0, %s56
      %s59 = sphi 0, %s58
      %s73 = sphi 0, %s59
      %s77 = sphi 0, %s77
      %s79 = sphi 0, %s77
      %s80 = sphi 0, %s79
      %s94 = sphi 0, %s80
      %s98 = sphi 0, %s98
      %s100 = sphi 0, %s98
      %s101 = sphi 0, %s100
      %s115 = sphi 0, %s101
      %s119 = sphi 0, %s119
      %s121 = sphi 0, %s119
      %s122 = sphi 0, %s121
      %s136 = sphi 0, %s122
      %s140 = sphi 0, %s140
      %s142 = sphi 0, %s140
      %s143 = sphi 0, %s142
      %s157 = sphi 0, %s143
      %s161 = sphi 0, %s161
      %s163 = sphi 0, %s161
      %s164 = sphi 0, %s163
      %s178 = sphi 0, %s164
      %s184 = sphi 0, %s186
      %s187 = sphi 0, %s184
      %s188 = sphi 0, %s187
      %s204 = sphi 0, %s188
      %s210 = sphi 0, %s212
      %s213 = sphi 0, %s210
      %s214 = sphi 0, %s213
      %s230 = sphi 0, %s214
    $region4: #{tpu_custom_call.1} parent=1 // loop_header_branch
      %25 = sbr.rel (%p23) target = $region8
    $region5: #{tpu_custom_call.1} parent=1 // loop_body
      %s27 = ssub.s32 %s22, 1
      %s28 = ssub.s32 %s22, 2
      %s29 = sadd.s32 %s22, 1
      %s30 = ssub.s32 %s22, %s29
      %p31 = scmp.eq.s32.totalorder %s30, 0
      %s33 = sadd.s32 %s32, 1
      %s34 = scalar_select %p31, %s32, %s33
      %p37 = pneg %p31
      %p38 = scmp.eq.s32.totalorder %s22, 1
      %p39 = por %p37, %p38
      %p40 = scmp.ne.s32.totalorder %s32, %s35
      %p41 = scmp.eq.s32.totalorder %s22, 0
      %p42 = por %p40, %p41
      %p43 = scmp.ne.s32.totalorder %s32, %s35
      %p44 = scmp.eq.s32.totalorder %s27, 1
      %p45 = por %p43, %p44
      %p46 = scmp.ne.s32.totalorder %s35, %s36
      %p47 = scmp.eq.s32.totalorder %s27, 0
      %p48 = por %p46, %p47
      %p49 = scmp.ne.s32.totalorder %s35, %s36
      %p50 = scmp.eq.s32.totalorder %s28, 1
      %p51 = por %p49, %p50
      %p53 = scmp.ne.s32.totalorder %s36, %s52
      %p54 = scmp.eq.s32.totalorder %s28, 0
      %p55 = por %p53, %p54
      %s57 = sadd.s32 %s56, 1
      %p60 = scmp.eq.s32.totalorder %s22, 1
      %p61 = scmp.ne.s32.totalorder %s56, %s58
      %p62 = scmp.eq.s32.totalorder %s22, 0
      %p63 = por %p61, %p62
      %p64 = scmp.ne.s32.totalorder %s56, %s58
      %p65 = scmp.eq.s32.totalorder %s27, 1
      %p66 = por %p64, %p65
      %p67 = scmp.ne.s32.totalorder %s58, %s59
      %p68 = scmp.eq.s32.totalorder %s27, 0
      %p69 = por %p67, %p68
      %p70 = scmp.ne.s32.totalorder %s58, %s59
      %p71 = scmp.eq.s32.totalorder %s28, 1
      %p72 = por %p70, %p71
      %p74 = scmp.ne.s32.totalorder %s59, %s73
      %p75 = scmp.eq.s32.totalorder %s28, 0
      %p76 = por %p74, %p75
      %s78 = sadd.s32 %s77, 1
      %p81 = scmp.eq.s32.totalorder %s22, 1
      %p82 = scmp.ne.s32.totalorder %s77, %s79
      %p83 = scmp.eq.s32.totalorder %s22, 0
      %p84 = por %p82, %p83
      %p85 = scmp.ne.s32.totalorder %s77, %s79
      %p86 = scmp.eq.s32.totalorder %s27, 1
      %p87 = por %p85, %p86
      %p88 = scmp.ne.s32.totalorder %s79, %s80
      %p89 = scmp.eq.s32.totalorder %s27, 0
      %p90 = por %p88, %p89
      %p91 = scmp.ne.s32.totalorder %s79, %s80
      %p92 = scmp.eq.s32.totalorder %s28, 1
      %p93 = por %p91, %p92
      %p95 = scmp.ne.s32.totalorder %s80, %s94
      %p96 = scmp.eq.s32.totalorder %s28, 0
      %p97 = por %p95, %p96
      %s99 = sadd.s32 %s98, 1
      %p102 = scmp.eq.s32.totalorder %s22, 1
      %p103 = scmp.ne.s32.totalorder %s98, %s100
      %p104 = scmp.eq.s32.totalorder %s22, 0
      %p105 = por %p103, %p104
      %p106 = scmp.ne.s32.totalorder %s98, %s100
      %p107 = scmp.eq.s32.totalorder %s27, 1
      %p108 = por %p106, %p107
      %p109 = scmp.ne.s32.totalorder %s100, %s101
      %p110 = scmp.eq.s32.totalorder %s27, 0
      %p111 = por %p109, %p110
      %p112 = scmp.ne.s32.totalorder %s100, %s101
      %p113 = scmp.eq.s32.totalorder %s28, 1
      %p114 = por %p112, %p113
      %p116 = scmp.ne.s32.totalorder %s101, %s115
      %p117 = scmp.eq.s32.totalorder %s28, 0
      %p118 = por %p116, %p117
      %s120 = sadd.s32 %s119, 1
      %p123 = scmp.eq.s32.totalorder %s22, 1
      %p124 = scmp.ne.s32.totalorder %s119, %s121
      %p125 = scmp.eq.s32.totalorder %s22, 0
      %p126 = por %p124, %p125
      %p127 = scmp.ne.s32.totalorder %s119, %s121
      %p128 = scmp.eq.s32.totalorder %s27, 1
      %p129 = por %p127, %p128
      %p130 = scmp.ne.s32.totalorder %s121, %s122
      %p131 = scmp.eq.s32.totalorder %s27, 0
      %p132 = por %p130, %p131
      %p133 = scmp.ne.s32.totalorder %s121, %s122
      %p134 = scmp.eq.s32.totalorder %s28, 1
      %p135 = por %p133, %p134
      %p137 = scmp.ne.s32.totalorder %s122, %s136
      %p138 = scmp.eq.s32.totalorder %s28, 0
      %p139 = por %p137, %p138
      %s141 = sadd.s32 %s140, 1
      %p144 = scmp.eq.s32.totalorder %s22, 1
      %p145 = scmp.ne.s32.totalorder %s140, %s142
      %p146 = scmp.eq.s32.totalorder %s22, 0
      %p147 = por %p145, %p146
      %p148 = scmp.ne.s32.totalorder %s140, %s142
      %p149 = scmp.eq.s32.totalorder %s27, 1
      %p150 = por %p148, %p149
      %p151 = scmp.ne.s32.totalorder %s142, %s143
      %p152 = scmp.eq.s32.totalorder %s27, 0
      %p153 = por %p151, %p152
      %p154 = scmp.ne.s32.totalorder %s142, %s143
      %p155 = scmp.eq.s32.totalorder %s28, 1
      %p156 = por %p154, %p155
      %p158 = scmp.ne.s32.totalorder %s143, %s157
      %p159 = scmp.eq.s32.totalorder %s28, 0
      %p160 = por %p158, %p159
      %s162 = sadd.s32 %s161, 1
      %p165 = scmp.eq.s32.totalorder %s22, 1
      %p166 = scmp.ne.s32.totalorder %s161, %s163
      %p167 = scmp.eq.s32.totalorder %s22, 0
      %p168 = por %p166, %p167
      %p169 = scmp.ne.s32.totalorder %s161, %s163
      %p170 = scmp.eq.s32.totalorder %s27, 1
      %p171 = por %p169, %p170
      %p172 = scmp.ne.s32.totalorder %s163, %s164
      %p173 = scmp.eq.s32.totalorder %s27, 0
      %p174 = por %p172, %p173
      %p175 = scmp.ne.s32.totalorder %s163, %s164
      %p176 = scmp.eq.s32.totalorder %s28, 1
      %p177 = por %p175, %p176
      %p179 = scmp.ne.s32.totalorder %s164, %s178
      %p180 = scmp.eq.s32.totalorder %s28, 0
      %p181 = por %p179, %p180
      %s182 = ssub.s32 %s22, %s29
      %p183 = scmp.eq.s32.totalorder %s182, 0
      %s185 = sadd.s32 %s184, 1
      %s186 = scalar_select %p183, %s184, %s185
      %p189 = pneg %p183
      %p190 = scmp.eq.s32.totalorder %s22, 1
      %p191 = por %p189, %p190
      %p192 = scmp.ne.s32.totalorder %s184, %s187
      %p193 = scmp.eq.s32.totalorder %s22, 0
      %p194 = por %p192, %p193
      %p195 = scmp.ne.s32.totalorder %s184, %s187
      %p196 = scmp.eq.s32.totalorder %s27, 1
      %p197 = por %p195, %p196
      %p198 = scmp.ne.s32.totalorder %s187, %s188
      %p199 = scmp.eq.s32.totalorder %s27, 0
      %p200 = por %p198, %p199
      %p201 = scmp.ne.s32.totalorder %s187, %s188
      %p202 = scmp.eq.s32.totalorder %s28, 1
      %p203 = por %p201, %p202
      %p205 = scmp.ne.s32.totalorder %s188, %s204
      %p206 = scmp.eq.s32.totalorder %s28, 0
      %p207 = por %p205, %p206
      %s208 = ssub.s32 %s22, %s29
      %p209 = scmp.eq.s32.totalorder %s208, 0
      %s211 = sadd.s32 %s210, 1
      %s212 = scalar_select %p209, %s210, %s211
      %p215 = pneg %p209
      %p216 = scmp.eq.s32.totalorder %s22, 1
      %p217 = por %p215, %p216
      %p218 = scmp.ne.s32.totalorder %s210, %s213
      %p219 = scmp.eq.s32.totalorder %s22, 0
      %p220 = por %p218, %p219
      %p221 = scmp.ne.s32.totalorder %s210, %s213
      %p222 = scmp.eq.s32.totalorder %s27, 1
      %p223 = por %p221, %p222
      %p224 = scmp.ne.s32.totalorder %s213, %s214
      %p225 = scmp.eq.s32.totalorder %s27, 0
      %p226 = por %p224, %p225
      %p227 = scmp.ne.s32.totalorder %s213, %s214
      %p228 = scmp.eq.s32.totalorder %s28, 1
      %p229 = por %p227, %p228
      %p231 = scmp.ne.s32.totalorder %s214, %s230
      %p232 = scmp.eq.s32.totalorder %s28, 0
      %p233 = por %p231, %p232
      %p234 = scmp.le.s32.totalorder 1, %s22
      %p235 = scmp.lt.s32.totalorder %s22, 3
      %p236 = pnand %p234, %p235
      %p237 = pneg %p236
      // Predicated region
      $region9: #{tpu_custom_call.1} parent=5 // pred_check
        _
      $region10: #{tpu_custom_call.1} parent=5 // pred_check_branch
        %239 = sbr.rel (%p236) target = $region12
      $region11: #{tpu_custom_call.1} parent=5 // pred_region
        %s240 = ssub.s32 %s22, 1
        // Predicated region
        $region13: #{tpu_custom_call.1} parent=11 // pred_check
          %p241 = pneg %p69
        $region14: #{tpu_custom_call.1} parent=11 // pred_check_branch
          %243 = sbr.rel (%p241) target = $region16
        $region15: #{tpu_custom_call.1} parent=11 // pred_region
          _
        $region16: #{tpu_custom_call.1} parent=11 // pred_fallthru
          _
        // Predicated region
        $region17: #{tpu_custom_call.1} parent=11 // pred_check
          %p244 = pneg %p90
        $region18: #{tpu_custom_call.1} parent=11 // pred_check_branch
          %246 = sbr.rel (%p244) target = $region20
        $region19: #{tpu_custom_call.1} parent=11 // pred_region
          %s248 = ssub.s32 16, 16
          %249 = vsyncadd [#allocation3], %s248
          %s251 = sshll.u32 [#allocation2], 4
          %s252 = int_to_ptr.vmem [resolvable:$true] %s251
          %254 = dma.hbm_to_vmem [thread:$0]  %s2, 16, %s252, [#allocation3]
        $region20: #{tpu_custom_call.1} parent=11 // pred_fallthru
          _
        // Predicated region
        $region21: #{tpu_custom_call.1} parent=11 // pred_check
          %p255 = pneg %p111
        $region22: #{tpu_custom_call.1} parent=11 // pred_check_branch
          %257 = sbr.rel (%p255) target = $region24
        $region23: #{tpu_custom_call.1} parent=11 // pred_region
          _
        $region24: #{tpu_custom_call.1} parent=11 // pred_fallthru
          _
        // Predicated region
        $region25: #{tpu_custom_call.1} parent=11 // pred_check
          %p258 = pneg %p132
        $region26: #{tpu_custom_call.1} parent=11 // pred_check_branch
          %260 = sbr.rel (%p258) target = $region28
        $region27: #{tpu_custom_call.1} parent=11 // pred_region
          _
        $region28: #{tpu_custom_call.1} parent=11 // pred_fallthru
          _
        // Predicated region
        $region29: #{tpu_custom_call.1} parent=11 // pred_check
          %p261 = pneg %p153
        $region30: #{tpu_custom_call.1} parent=11 // pred_check_branch
          %263 = sbr.rel (%p261) target = $region32
        $region31: #{tpu_custom_call.1} parent=11 // pred_region
          _
        $region32: #{tpu_custom_call.1} parent=11 // pred_fallthru
          _
        // Predicated region
        $region33: #{tpu_custom_call.1} parent=11 // pred_check
          %p264 = pneg %p174
        $region34: #{tpu_custom_call.1} parent=11 // pred_check_branch
          %266 = sbr.rel (%p264) target = $region36
        $region35: #{tpu_custom_call.1} parent=11 // pred_region
          _
        $region36: #{tpu_custom_call.1} parent=11 // pred_fallthru
          _
      $region12: #{tpu_custom_call.1} parent=5 // pred_fallthru
        _
      %p267 = scmp.lt.s32.totalorder %s22, 2
      // Predicated region
      $region37: #{tpu_custom_call.1} parent=5 // pred_check
        %p268 = pneg %p267
      $region38: #{tpu_custom_call.1} parent=5 // pred_check_branch
        %270 = sbr.rel (%p268) target = $region40
      $region39: #{tpu_custom_call.1} parent=5 // pred_region
        // Predicated region
        $region41: #{tpu_custom_call.1} parent=39 // pred_check
          %p271 = pneg %p42
        $region42: #{tpu_custom_call.1} parent=39 // pred_check_branch
          %273 = sbr.rel (%p271) target = $region44
        $region43: #{tpu_custom_call.1} parent=39 // pred_region
          %p274 = scmp.lt.s32.totalorder %s22, 1
          %s275 = scalar_select %p274, %s22, 1
          %s276 = smul.addr %s275, 4
          %s277 = scalar_lea.vmem %s0, %s276
        $region44: #{tpu_custom_call.1} parent=39 // pred_fallthru
          _
      $region40: #{tpu_custom_call.1} parent=5 // pred_fallthru
        _
      %p278 = scmp.le.s32.totalorder 1, %s22
      %p279 = scmp.lt.s32.totalorder %s22, 3
      %p280 = pnand %p278, %p279
      %p281 = pneg %p280
      // Predicated region
      $region45: #{tpu_custom_call.1} parent=5 // pred_check
        _
      $region46: #{tpu_custom_call.1} parent=5 // pred_check_branch
        %283 = sbr.rel (%p280) target = $region48
      $region47: #{tpu_custom_call.1} parent=5 // pred_region
        %s284 = ssub.s32 %s22, 1
        // Predicated region
        $region49: #{tpu_custom_call.1} parent=47 // pred_check
          %p285 = pneg %p90
        $region50: #{tpu_custom_call.1} parent=47 // pred_check_branch
          %287 = sbr.rel (%p285) target = $region52
        $region51: #{tpu_custom_call.1} parent=47 // pred_region
          %288 = dma.done [#allocation3], 16
        $region52: #{tpu_custom_call.1} parent=47 // pred_fallthru
          _
        %p289 = scmp.lt.s32.totalorder %s27, 1
        %s290 = scalar_select %p289, %s27, 1
        %s291 = smul.addr %s290, 4
        %s292 = scalar_lea.vmem %s0, %s291
        %p293 = pneg %p48
        %p294 = pneg %p45
        %p295 = pneg %p69
        %p296 = pneg %p66
        %p297 = pneg %p90
        %p298 = pneg %p87
        %p299 = pneg %p111
        %p300 = pneg %p108
        %p301 = pneg %p132
        %p302 = pneg %p129
        %p303 = pneg %p153
        %p304 = pneg %p150
        %p305 = pneg %p174
        %p306 = pneg %p171
        %p307 = pneg %p200
        %p308 = pneg %p197
        %s309 = sand.u32 %s187, 1
        %s310 = scalar_lea.sflag [#allocation4], %s309
        %s311 = sand.u32 %s187, 1
        %s312 = smul.addr %s311, 4
        %s313 = scalar_lea.vmem [#allocation5], %s312
        %p314 = pneg %p226
        %p315 = pneg %p223
        %s316 = sand.u32 %s213, 1
        %s317 = scalar_lea.sflag [#allocation7], %s316
        %s318 = sand.u32 %s213, 1
        %s319 = smul.addr %s318, 8
        %s320 = scalar_lea.vmem [#allocation6], %s319
        %p321 = scmp.lt.s32.totalorder %s27, 1
        %s322 = scalar_select %p321, %s27, 1
        %s323 = smul.addr %s322, 4
        %s324 = scalar_lea.vmem %s0, %s323
        %v326 = vld [vmem:[%s324] sm:$0xf]
        %v327 = vld [vmem:[%s1] sm:$0xf]
        %v328 = vld [vmem:[%s1 + $0x4] sm:$0xf]
        %v329 = vld [vmem:[%s1 + $0x8] sm:$0xf]
        %v330 = vld [vmem:[%s1 + $0xc] sm:$0xf]
        %v331 = vld [vmem:[#allocation2] sm:$0x1]
        %v333 = vlaneseq
        %v334 = vshrl.u32 %v333, 7
        %v335 = vsub.s32 0, %v334
        %v336 = vrot.slane %v331, %v335
        %v342 = vunpack.c.l.b16 %v327
        %v343 = vunpack.c.l.b16 %v328
        %v344 = vunpack.c.l.b16 %v329
        %v345 = vunpack.c.l.b16 %v330
        %v346 = vpack.c.b16 %v343, %v342
        %v347 = vpack.c.b16 %v345, %v344
        %vm350 = vcmask 261120
        %v352 = vsel %vm350, %v326, 0
        %354 = vmatprep.subr.bf16.mxu0 0
        %355 = vmatpush1.bf16.msra.mxu0 %v346
        %356 = vmatprep.subr.bf16.mxu0 0
        %357 = vmatpush1.bf16.msra.mxu0 %v347
        %358 = vmatprep.subr.bf16.mxu0 0
        %359 = vmatpush1.bf16.msra.mxu0 0
        %360 = vmatprep.subr.bf16.mxu0 0
        %361 = vmatpush1.bf16.msra.mxu0 0
        %362 = vmatprep.subr.bf16.mxu0 0
        %363 = vmatpush1.bf16.msra.mxu0 0
        %364 = vmatprep.subr.bf16.mxu0 0
        %365 = vmatpush1.bf16.msra.mxu0 0
        %366 = vmatprep.subr.bf16.mxu0 0
        %367 = vmatpush1.bf16.msra.mxu0 0
        %368 = vmatprep.subr.bf16.mxu0 0
        %369 = vmatpush1.bf16.msra.mxu0 0
        %370 = vmatprep.subr.bf16.mxu0 0
        %371 = vmatpush1.bf16.msra.mxu0 0
        %372 = vmatprep.subr.bf16.mxu0 0
        %373 = vmatpush1.bf16.msra.mxu0 0
        %374 = vmatprep.subr.bf16.mxu0 0
        %375 = vmatpush1.bf16.msra.mxu0 0
        %376 = vmatprep.subr.bf16.mxu0 0
        %377 = vmatpush1.bf16.msra.mxu0 0
        %378 = vmatprep.subr.bf16.mxu0 0
        %379 = vmatpush1.bf16.msra.mxu0 0
        %380 = vmatprep.subr.bf16.mxu0 0
        %381 = vmatpush1.bf16.msra.mxu0 0
        %382 = vmatprep.subr.bf16.mxu0 0
        %383 = vmatpush1.bf16.msra.mxu0 0
        %384 = vmatprep.subr.bf16.mxu0 0
        %385 = vmatpush1.bf16.msra.mxu0 0
        %386 = vmatprep.mubr.bf16.mxu0 0
        %387 = vmatmul.mubr.bf16.gmra.mrb[0].mxu0 %v352
        %v388 = vpop.f32.mrb[0].mxu0
        %v389 = vadd.f32 %v336, %v388
        %v390 = vpop.f32.mrb[0].mxu0
        %v391 = vpop.f32.mrb[0].mxu0
        %v392 = vpop.f32.mrb[0].mxu0
        %393 = vdwg.mxu0
        %395 = vrot.lane.b32.xlu0 %v389, 4
        %v396 = vpop.permute.xlu0 %395
        %398 = vrot.lane.b32.xlu0 %v389, 8
        %v399 = vpop.permute.xlu0 %398
        %401 = vrot.lane.b32.xlu0 %v389, 12
        %v402 = vpop.permute.xlu0 %401
        %404 = vrot.lane.b32.xlu0 %v389, 16
        %v405 = vpop.permute.xlu0 %404
        %407 = vrot.lane.b32.xlu0 %v389, 20
        %v408 = vpop.permute.xlu0 %407
        %410 = vrot.lane.b32.xlu0 %v389, 24
        %v411 = vpop.permute.xlu0 %410
        %413 = vrot.lane.b32.xlu0 %v389, 28
        %v414 = vpop.permute.xlu0 %413
        %vm416 = vcmask 31744
        %v417 = vsel %vm416, %v389, %v396
        %vm418 = vcmask 64512
        %v419 = vsel %vm418, %v417, %v399
        %vm420 = vcmask 97280
        %v421 = vsel %vm420, %v419, %v402
        %vm422 = vcmask 130048
        %v423 = vsel %vm422, %v421, %v405
        %vm424 = vcmask 162816
        %v425 = vsel %vm424, %v423, %v408
        %vm426 = vcmask 195584
        %v427 = vsel %vm426, %v425, %v411
        %vm428 = vcmask 228352
        %v429 = vsel %vm428, %v427, %v414
        %430 = vrot.lane.b32.xlu0 %v389, 96
        %v431 = vpop.permute.xlu0 %430
        %v433 = vmul.f32 %v429, %v431
        %v434 = vpack.c.bf16 %v433, %v433
        %v435 = vld [vmem:[%s3] sm:$0xf]
        %v436 = vld [vmem:[%s3 + $0x4] sm:$0xf]
        %v437 = vld [vmem:[%s3 + $0x8] sm:$0xf]
        %v438 = vld [vmem:[%s3 + $0xc] sm:$0xf]
        %v443 = vunpack.c.l.b16 %v435
        %v444 = vunpack.c.l.b16 %v436
        %v445 = vunpack.c.l.b16 %v437
        %v446 = vunpack.c.l.b16 %v438
        %v447 = vpack.c.b16 %v444, %v443
        %v448 = vpack.c.b16 %v446, %v445
        %v452 = vsel %vm350, %v434, 0
        %454 = vmatprep.subr.bf16.mxu0 0
        %455 = vmatpush1.bf16.msra.mxu0 %v447
        %456 = vmatprep.subr.bf16.mxu0 0
        %457 = vmatpush1.bf16.msra.mxu0 %v448
        %458 = vmatprep.subr.bf16.mxu0 0
        %459 = vmatpush1.bf16.msra.mxu0 0
        %460 = vmatprep.subr.bf16.mxu0 0
        %461 = vmatpush1.bf16.msra.mxu0 0
        %462 = vmatprep.subr.bf16.mxu0 0
        %463 = vmatpush1.bf16.msra.mxu0 0
        %464 = vmatprep.subr.bf16.mxu0 0
        %465 = vmatpush1.bf16.msra.mxu0 0
        %466 = vmatprep.subr.bf16.mxu0 0
        %467 = vmatpush1.bf16.msra.mxu0 0
        %468 = vmatprep.subr.bf16.mxu0 0
        %469 = vmatpush1.bf16.msra.mxu0 0
        %470 = vmatprep.subr.bf16.mxu0 0
        %471 = vmatpush1.bf16.msra.mxu0 0
        %472 = vmatprep.subr.bf16.mxu0 0
        %473 = vmatpush1.bf16.msra.mxu0 0
        %474 = vmatprep.subr.bf16.mxu0 0
        %475 = vmatpush1.bf16.msra.mxu0 0
        %476 = vmatprep.subr.bf16.mxu0 0
        %477 = vmatpush1.bf16.msra.mxu0 0
        %478 = vmatprep.subr.bf16.mxu0 0
        %479 = vmatpush1.bf16.msra.mxu0 0
        %480 = vmatprep.subr.bf16.mxu0 0
        %481 = vmatpush1.bf16.msra.mxu0 0
        %482 = vmatprep.subr.bf16.mxu0 0
        %483 = vmatpush1.bf16.msra.mxu0 0
        %484 = vmatprep.subr.bf16.mxu0 0
        %485 = vmatpush1.bf16.msra.mxu0 0
        %486 = vmatprep.mubr.bf16.mxu0 0
        %487 = vmatmul.mubr.bf16.gmra.mrb[0].mxu0 %v452
        %v488 = vpop.f32.mrb[0].mxu0
        %v489 = vadd.f32 0.0, %v488
        %v490 = vpop.f32.mrb[0].mxu0
        %v491 = vpop.f32.mrb[0].mxu0
        %v492 = vpop.f32.mrb[0].mxu0
        %493 = vdwg.mxu0
        %494 = vrot.lane.b32.xlu0 %v389, 124
        %v495 = vpop.permute.xlu0 %494
        %v497 = vsel %vm416, %v495, %v389
        %v498 = vsel %vm418, %v497, %v396
        %v499 = vsel %vm420, %v498, %v399
        %v500 = vsel %vm422, %v499, %v402
        %v501 = vsel %vm424, %v500, %v405
        %v502 = vsel %vm426, %v501, %v408
        %v503 = vsel %vm428, %v502, %v411
        %v504 = vmul.f32 %v503, %v431
        %v505 = vpack.c.bf16 %v504, %v504
        %v507 = vsel %vm350, %v505, 0
        %509 = vmatprep.subr.bf16.mxu0 0
        %510 = vmatpush1.bf16.msra.mxu0 %v447
        %511 = vmatprep.subr.bf16.mxu0 0
        %512 = vmatpush1.bf16.msra.mxu0 %v448
        %513 = vmatprep.subr.bf16.mxu0 0
        %514 = vmatpush1.bf16.msra.mxu0 0
        %515 = vmatprep.subr.bf16.mxu0 0
        %516 = vmatpush1.bf16.msra.mxu0 0
        %517 = vmatprep.subr.bf16.mxu0 0
        %518 = vmatpush1.bf16.msra.mxu0 0
        %519 = vmatprep.subr.bf16.mxu0 0
        %520 = vmatpush1.bf16.msra.mxu0 0
        %521 = vmatprep.subr.bf16.mxu0 0
        %522 = vmatpush1.bf16.msra.mxu0 0
        %523 = vmatprep.subr.bf16.mxu0 0
        %524 = vmatpush1.bf16.msra.mxu0 0
        %525 = vmatprep.subr.bf16.mxu0 0
        %526 = vmatpush1.bf16.msra.mxu0 0
        %527 = vmatprep.subr.bf16.mxu0 0
        %528 = vmatpush1.bf16.msra.mxu0 0
        %529 = vmatprep.subr.bf16.mxu0 0
        %530 = vmatpush1.bf16.msra.mxu0 0
        %531 = vmatprep.subr.bf16.mxu0 0
        %532 = vmatpush1.bf16.msra.mxu0 0
        %533 = vmatprep.subr.bf16.mxu0 0
        %534 = vmatpush1.bf16.msra.mxu0 0
        %535 = vmatprep.subr.bf16.mxu0 0
        %536 = vmatpush1.bf16.msra.mxu0 0
        %537 = vmatprep.subr.bf16.mxu0 0
        %538 = vmatpush1.bf16.msra.mxu0 0
        %539 = vmatprep.subr.bf16.mxu0 0
        %540 = vmatpush1.bf16.msra.mxu0 0
        %541 = vmatprep.mubr.bf16.mxu0 0
        %542 = vmatmul.mubr.bf16.gmra.mrb[0].mxu0 %v507
        %v543 = vpop.f32.mrb[0].mxu0
        %v544 = vadd.f32 0.0, %v543
        %v545 = vpop.f32.mrb[0].mxu0
        %v546 = vpop.f32.mrb[0].mxu0
        %v547 = vpop.f32.mrb[0].mxu0
        %548 = vdwg.mxu0
        %549 = vrot.lane.b32.xlu0 %v389, 120
        %v550 = vpop.permute.xlu0 %549
        %v552 = vsel %vm416, %v550, %v495
        %v553 = vsel %vm418, %v552, %v389
        %v554 = vsel %vm420, %v553, %v396
        %v555 = vsel %vm422, %v554, %v399
        %v556 = vsel %vm424, %v555, %v402
        %v557 = vsel %vm426, %v556, %v405
        %v558 = vsel %vm428, %v557, %v408
        %v559 = vmul.f32 %v558, %v431
        %v560 = vpack.c.bf16 %v559, %v559
        %v562 = vsel %vm350, %v560, 0
        %564 = vmatprep.subr.bf16.mxu0 0
        %565 = vmatpush1.bf16.msra.mxu0 %v447
        %566 = vmatprep.subr.bf16.mxu0 0
        %567 = vmatpush1.bf16.msra.mxu0 %v448
        %568 = vmatprep.subr.bf16.mxu0 0
        %569 = vmatpush1.bf16.msra.mxu0 0
        %570 = vmatprep.subr.bf16.mxu0 0
        %571 = vmatpush1.bf16.msra.mxu0 0
        %572 = vmatprep.subr.bf16.mxu0 0
        %573 = vmatpush1.bf16.msra.mxu0 0
        %574 = vmatprep.subr.bf16.mxu0 0
        %575 = vmatpush1.bf16.msra.mxu0 0
        %576 = vmatprep.subr.bf16.mxu0 0
        %577 = vmatpush1.bf16.msra.mxu0 0
        %578 = vmatprep.subr.bf16.mxu0 0
        %579 = vmatpush1.bf16.msra.mxu0 0
        %580 = vmatprep.subr.bf16.mxu0 0
        %581 = vmatpush1.bf16.msra.mxu0 0
        %582 = vmatprep.subr.bf16.mxu0 0
        %583 = vmatpush1.bf16.msra.mxu0 0
        %584 = vmatprep.subr.bf16.mxu0 0
        %585 = vmatpush1.bf16.msra.mxu0 0
        %586 = vmatprep.subr.bf16.mxu0 0
        %587 = vmatpush1.bf16.msra.mxu0 0
        %588 = vmatprep.subr.bf16.mxu0 0
        %589 = vmatpush1.bf16.msra.mxu0 0
        %590 = vmatprep.subr.bf16.mxu0 0
        %591 = vmatpush1.bf16.msra.mxu0 0
        %592 = vmatprep.subr.bf16.mxu0 0
        %593 = vmatpush1.bf16.msra.mxu0 0
        %594 = vmatprep.subr.bf16.mxu0 0
        %595 = vmatpush1.bf16.msra.mxu0 0
        %596 = vmatprep.mubr.bf16.mxu0 0
        %597 = vmatmul.mubr.bf16.gmra.mrb[0].mxu0 %v562
        %v598 = vpop.f32.mrb[0].mxu0
        %v599 = vadd.f32 0.0, %v598
        %v600 = vpop.f32.mrb[0].mxu0
        %v601 = vpop.f32.mrb[0].mxu0
        %v602 = vpop.f32.mrb[0].mxu0
        %603 = vdwg.mxu0
        %604 = vrot.lane.b32.xlu0 %v389, 116
        %v605 = vpop.permute.xlu0 %604
        %v607 = vsel %vm416, %v605, %v550
        %v608 = vsel %vm418, %v607, %v495
        %v609 = vsel %vm420, %v608, %v389
        %v610 = vsel %vm422, %v609, %v396
        %v611 = vsel %vm424, %v610, %v399
        %v612 = vsel %vm426, %v611, %v402
        %v613 = vsel %vm428, %v612, %v405
        %v614 = vmul.f32 %v613, %v431
        %v615 = vpack.c.bf16 %v614, %v614
        %v617 = vsel %vm350, %v615, 0
        %619 = vmatprep.subr.bf16.mxu0 0
        %620 = vmatpush1.bf16.msra.mxu0 %v447
        %621 = vmatprep.subr.bf16.mxu0 0
        %622 = vmatpush1.bf16.msra.mxu0 %v448
        %623 = vmatprep.subr.bf16.mxu0 0
        %624 = vmatpush1.bf16.msra.mxu0 0
        %625 = vmatprep.subr.bf16.mxu0 0
        %626 = vmatpush1.bf16.msra.mxu0 0
        %627 = vmatprep.subr.bf16.mxu0 0
        %628 = vmatpush1.bf16.msra.mxu0 0
        %629 = vmatprep.subr.bf16.mxu0 0
        %630 = vmatpush1.bf16.msra.mxu0 0
        %631 = vmatprep.subr.bf16.mxu0 0
        %632 = vmatpush1.bf16.msra.mxu0 0
        %633 = vmatprep.subr.bf16.mxu0 0
        %634 = vmatpush1.bf16.msra.mxu0 0
        %635 = vmatprep.subr.bf16.mxu0 0
        %636 = vmatpush1.bf16.msra.mxu0 0
        %637 = vmatprep.subr.bf16.mxu0 0
        %638 = vmatpush1.bf16.msra.mxu0 0
        %639 = vmatprep.subr.bf16.mxu0 0
        %640 = vmatpush1.bf16.msra.mxu0 0
        %641 = vmatprep.subr.bf16.mxu0 0
        %642 = vmatpush1.bf16.msra.mxu0 0
        %643 = vmatprep.subr.bf16.mxu0 0
        %644 = vmatpush1.bf16.msra.mxu0 0
        %645 = vmatprep.subr.bf16.mxu0 0
        %646 = vmatpush1.bf16.msra.mxu0 0
        %647 = vmatprep.subr.bf16.mxu0 0
        %648 = vmatpush1.bf16.msra.mxu0 0
        %649 = vmatprep.subr.bf16.mxu0 0
        %650 = vmatpush1.bf16.msra.mxu0 0
        %651 = vmatprep.mubr.bf16.mxu0 0
        %652 = vmatmul.mubr.bf16.gmra.mrb[0].mxu0 %v617
        %v653 = vpop.f32.mrb[0].mxu0
        %v654 = vadd.f32 0.0, %v653
        %v655 = vpop.f32.mrb[0].mxu0
        %v656 = vpop.f32.mrb[0].mxu0
        %v657 = vpop.f32.mrb[0].mxu0
        %658 = vdwg.mxu0
        %659 = vrot.lane.b32.xlu0 %v389, 112
        %v660 = vpop.permute.xlu0 %659
        %v662 = vsel %vm416, %v660, %v605
        %v663 = vsel %vm418, %v662, %v550
        %v664 = vsel %vm420, %v663, %v495
        %v665 = vsel %vm422, %v664, %v389
        %v666 = vsel %vm424, %v665, %v396
        %v667 = vsel %vm426, %v666, %v399
        %v668 = vsel %vm428, %v667, %v402
        %v669 = vmul.f32 %v668, %v431
        %v670 = vpack.c.bf16 %v669, %v669
        %v672 = vsel %vm350, %v670, 0
        %674 = vmatprep.subr.bf16.mxu0 0
        %675 = vmatpush1.bf16.msra.mxu0 %v447
        %676 = vmatprep.subr.bf16.mxu0 0
        %677 = vmatpush1.bf16.msra.mxu0 %v448
        %678 = vmatprep.subr.bf16.mxu0 0
        %679 = vmatpush1.bf16.msra.mxu0 0
        %680 = vmatprep.subr.bf16.mxu0 0
        %681 = vmatpush1.bf16.msra.mxu0 0
        %682 = vmatprep.subr.bf16.mxu0 0
        %683 = vmatpush1.bf16.msra.mxu0 0
        %684 = vmatprep.subr.bf16.mxu0 0
        %685 = vmatpush1.bf16.msra.mxu0 0
        %686 = vmatprep.subr.bf16.mxu0 0
        %687 = vmatpush1.bf16.msra.mxu0 0
        %688 = vmatprep.subr.bf16.mxu0 0
        %689 = vmatpush1.bf16.msra.mxu0 0
        %690 = vmatprep.subr.bf16.mxu0 0
        %691 = vmatpush1.bf16.msra.mxu0 0
        %692 = vmatprep.subr.bf16.mxu0 0
        %693 = vmatpush1.bf16.msra.mxu0 0
        %694 = vmatprep.subr.bf16.mxu0 0
        %695 = vmatpush1.bf16.msra.mxu0 0
        %696 = vmatprep.subr.bf16.mxu0 0
        %697 = vmatpush1.bf16.msra.mxu0 0
        %698 = vmatprep.subr.bf16.mxu0 0
        %699 = vmatpush1.bf16.msra.mxu0 0
        %700 = vmatprep.subr.bf16.mxu0 0
        %701 = vmatpush1.bf16.msra.mxu0 0
        %702 = vmatprep.subr.bf16.mxu0 0
        %703 = vmatpush1.bf16.msra.mxu0 0
        %704 = vmatprep.subr.bf16.mxu0 0
        %705 = vmatpush1.bf16.msra.mxu0 0
        %706 = vmatprep.mubr.bf16.mxu0 0
        %707 = vmatmul.mubr.bf16.gmra.mrb[0].mxu0 %v672
        %v708 = vpop.f32.mrb[0].mxu0
        %v709 = vadd.f32 0.0, %v708
        %v710 = vpop.f32.mrb[0].mxu0
        %v711 = vpop.f32.mrb[0].mxu0
        %v712 = vpop.f32.mrb[0].mxu0
        %713 = vdwg.mxu0
        %714 = vrot.lane.b32.xlu0 %v389, 108
        %v715 = vpop.permute.xlu0 %714
        %v717 = vsel %vm416, %v715, %v660
        %v718 = vsel %vm418, %v717, %v605
        %v719 = vsel %vm420, %v718, %v550
        %v720 = vsel %vm422, %v719, %v495
        %v721 = vsel %vm424, %v720, %v389
        %v722 = vsel %vm426, %v721, %v396
        %v723 = vsel %vm428, %v722, %v399
        %v724 = vmul.f32 %v723, %v431
        %v725 = vpack.c.bf16 %v724, %v724
        %v727 = vsel %vm350, %v725, 0
        %729 = vmatprep.subr.bf16.mxu0 0
        %730 = vmatpush1.bf16.msra.mxu0 %v447
        %731 = vmatprep.subr.bf16.mxu0 0
        %732 = vmatpush1.bf16.msra.mxu0 %v448
        %733 = vmatprep.subr.bf16.mxu0 0
        %734 = vmatpush1.bf16.msra.mxu0 0
        %735 = vmatprep.subr.bf16.mxu0 0
        %736 = vmatpush1.bf16.msra.mxu0 0
        %737 = vmatprep.subr.bf16.mxu0 0
        %738 = vmatpush1.bf16.msra.mxu0 0
        %739 = vmatprep.subr.bf16.mxu0 0
        %740 = vmatpush1.bf16.msra.mxu0 0
        %741 = vmatprep.subr.bf16.mxu0 0
        %742 = vmatpush1.bf16.msra.mxu0 0
        %743 = vmatprep.subr.bf16.mxu0 0
        %744 = vmatpush1.bf16.msra.mxu0 0
        %745 = vmatprep.subr.bf16.mxu0 0
        %746 = vmatpush1.bf16.msra.mxu0 0
        %747 = vmatprep.subr.bf16.mxu0 0
        %748 = vmatpush1.bf16.msra.mxu0 0
        %749 = vmatprep.subr.bf16.mxu0 0
        %750 = vmatpush1.bf16.msra.mxu0 0
        %751 = vmatprep.subr.bf16.mxu0 0
        %752 = vmatpush1.bf16.msra.mxu0 0
        %753 = vmatprep.subr.bf16.mxu0 0
        %754 = vmatpush1.bf16.msra.mxu0 0
        %755 = vmatprep.subr.bf16.mxu0 0
        %756 = vmatpush1.bf16.msra.mxu0 0
        %757 = vmatprep.subr.bf16.mxu0 0
        %758 = vmatpush1.bf16.msra.mxu0 0
        %759 = vmatprep.subr.bf16.mxu0 0
        %760 = vmatpush1.bf16.msra.mxu0 0
        %761 = vmatprep.mubr.bf16.mxu0 0
        %762 = vmatmul.mubr.bf16.gmra.mrb[0].mxu0 %v727
        %v763 = vpop.f32.mrb[0].mxu0
        %v764 = vadd.f32 0.0, %v763
        %v765 = vpop.f32.mrb[0].mxu0
        %v766 = vpop.f32.mrb[0].mxu0
        %v767 = vpop.f32.mrb[0].mxu0
        %768 = vdwg.mxu0
        %769 = vrot.lane.b32.xlu0 %v389, 104
        %v770 = vpop.permute.xlu0 %769
        %v772 = vsel %vm416, %v770, %v715
        %v773 = vsel %vm418, %v772, %v660
        %v774 = vsel %vm420, %v773, %v605
        %v775 = vsel %vm422, %v774, %v550
        %v776 = vsel %vm424, %v775, %v495
        %v777 = vsel %vm426, %v776, %v389
        %v778 = vsel %vm428, %v777, %v396
        %v779 = vmul.f32 %v778, %v431
        %v780 = vpack.c.bf16 %v779, %v779
        %v782 = vsel %vm350, %v780, 0
        %784 = vmatprep.subr.bf16.mxu0 0
        %785 = vmatpush1.bf16.msra.mxu0 %v447
        %786 = vmatprep.subr.bf16.mxu0 0
        %787 = vmatpush1.bf16.msra.mxu0 %v448
        %788 = vmatprep.subr.bf16.mxu0 0
        %789 = vmatpush1.bf16.msra.mxu0 0
        %790 = vmatprep.subr.bf16.mxu0 0
        %791 = vmatpush1.bf16.msra.mxu0 0
        %792 = vmatprep.subr.bf16.mxu0 0
        %793 = vmatpush1.bf16.msra.mxu0 0
        %794 = vmatprep.subr.bf16.mxu0 0
        %795 = vmatpush1.bf16.msra.mxu0 0
        %796 = vmatprep.subr.bf16.mxu0 0
        %797 = vmatpush1.bf16.msra.mxu0 0
        %798 = vmatprep.subr.bf16.mxu0 0
        %799 = vmatpush1.bf16.msra.mxu0 0
        %800 = vmatprep.subr.bf16.mxu0 0
        %801 = vmatpush1.bf16.msra.mxu0 0
        %802 = vmatprep.subr.bf16.mxu0 0
        %803 = vmatpush1.bf16.msra.mxu0 0
        %804 = vmatprep.subr.bf16.mxu0 0
        %805 = vmatpush1.bf16.msra.mxu0 0
        %806 = vmatprep.subr.bf16.mxu0 0
        %807 = vmatpush1.bf16.msra.mxu0 0
        %808 = vmatprep.subr.bf16.mxu0 0
        %809 = vmatpush1.bf16.msra.mxu0 0
        %810 = vmatprep.subr.bf16.mxu0 0
        %811 = vmatpush1.bf16.msra.mxu0 0
        %812 = vmatprep.subr.bf16.mxu0 0
        %813 = vmatpush1.bf16.msra.mxu0 0
        %814 = vmatprep.subr.bf16.mxu0 0
        %815 = vmatpush1.bf16.msra.mxu0 0
        %816 = vmatprep.mubr.bf16.mxu0 0
        %817 = vmatmul.mubr.bf16.gmra.mrb[0].mxu0 %v782
        %v818 = vpop.f32.mrb[0].mxu0
        %v819 = vadd.f32 0.0, %v818
        %v820 = vpop.f32.mrb[0].mxu0
        %v821 = vpop.f32.mrb[0].mxu0
        %v822 = vpop.f32.mrb[0].mxu0
        %823 = vdwg.mxu0
        %824 = vrot.lane.b32.xlu0 %v389, 100
        %v825 = vpop.permute.xlu0 %824
        %v827 = vsel %vm416, %v825, %v770
        %v828 = vsel %vm418, %v827, %v715
        %v829 = vsel %vm420, %v828, %v660
        %v830 = vsel %vm422, %v829, %v605
        %v831 = vsel %vm424, %v830, %v550
        %v832 = vsel %vm426, %v831, %v495
        %v833 = vsel %vm428, %v832, %v389
        %v834 = vmul.f32 %v833, %v431
        %v835 = vpack.c.bf16 %v834, %v834
        %v837 = vsel %vm350, %v835, 0
        %839 = vmatprep.subr.bf16.mxu0 0
        %840 = vmatpush1.bf16.msra.mxu0 %v447
        %841 = vmatprep.subr.bf16.mxu0 0
        %842 = vmatpush1.bf16.msra.mxu0 %v448
        %843 = vmatprep.subr.bf16.mxu0 0
        %844 = vmatpush1.bf16.msra.mxu0 0
        %845 = vmatprep.subr.bf16.mxu0 0
        %846 = vmatpush1.bf16.msra.mxu0 0
        %847 = vmatprep.subr.bf16.mxu0 0
        %848 = vmatpush1.bf16.msra.mxu0 0
        %849 = vmatprep.subr.bf16.mxu0 0
        %850 = vmatpush1.bf16.msra.mxu0 0
        %851 = vmatprep.subr.bf16.mxu0 0
        %852 = vmatpush1.bf16.msra.mxu0 0
        %853 = vmatprep.subr.bf16.mxu0 0
        %854 = vmatpush1.bf16.msra.mxu0 0
        %855 = vmatprep.subr.bf16.mxu0 0
        %856 = vmatpush1.bf16.msra.mxu0 0
        %857 = vmatprep.subr.bf16.mxu0 0
        %858 = vmatpush1.bf16.msra.mxu0 0
        %859 = vmatprep.subr.bf16.mxu0 0
        %860 = vmatpush1.bf16.msra.mxu0 0
        %861 = vmatprep.subr.bf16.mxu0 0
        %862 = vmatpush1.bf16.msra.mxu0 0
        %863 = vmatprep.subr.bf16.mxu0 0
        %864 = vmatpush1.bf16.msra.mxu0 0
        %865 = vmatprep.subr.bf16.mxu0 0
        %866 = vmatpush1.bf16.msra.mxu0 0
        %867 = vmatprep.subr.bf16.mxu0 0
        %868 = vmatpush1.bf16.msra.mxu0 0
        %869 = vmatprep.subr.bf16.mxu0 0
        %870 = vmatpush1.bf16.msra.mxu0 0
        %871 = vmatprep.mubr.bf16.mxu0 0
        %872 = vmatmul.mubr.bf16.gmra.mrb[0].mxu0 %v837
        %v873 = vpop.f32.mrb[0].mxu0
        %v874 = vadd.f32 0.0, %v873
        %v875 = vpop.f32.mrb[0].mxu0
        %v876 = vpop.f32.mrb[0].mxu0
        %v877 = vpop.f32.mrb[0].mxu0
        %878 = vdwg.mxu0
        %880 = vrot.lane.b32.xlu0 %v544, 8
        %v881 = vpop.permute.xlu0 %880
        %884 = vrot.lane.b32.xlu0 %v599, 16
        %v885 = vpop.permute.xlu0 %884
        %888 = vrot.lane.b32.xlu0 %v654, 24
        %v889 = vpop.permute.xlu0 %888
        %892 = vrot.lane.b32.xlu0 %v709, 32
        %v893 = vpop.permute.xlu0 %892
        %896 = vrot.lane.b32.xlu0 %v764, 40
        %v897 = vpop.permute.xlu0 %896
        %900 = vrot.lane.b32.xlu0 %v819, 48
        %v901 = vpop.permute.xlu0 %900
        %904 = vrot.lane.b32.xlu0 %v874, 56
        %v905 = vpop.permute.xlu0 %904
        %v907 = vsel %vm418, %v489, %v881
        %v908 = vsel %vm422, %v907, %v885
        %v909 = vsel %vm426, %v908, %v889
        %v910 = vsel %vm350, %v909, %v893
        %vm911 = vcmask 326656
        %v912 = vsel %vm911, %v910, %v897
        %vm913 = vcmask 392192
        %v914 = vsel %vm913, %v912, %v901
        %vm915 = vcmask 457728
        %v916 = vsel %vm915, %v914, %v905
        %vm917 = vcmask 523264
        %v918 = vsel %vm917, %v916, -inf
        %919 = vmax.xlane.f32.xlu0 %v918
        %v920 = vpop.xlane.xlu0 %919
        %v921 = vsub.f32 %v916, %v920
        %v922 = vmul.f32 %v921, 1.442695
        %v923 = vpow.pop %v922
        %v924 = vpack.c.bf16 %v923, %v923
        %v925 = vld [vmem:[%s6] sm:$0xf]
        %v926 = vld [vmem:[%s6 + $0x4] sm:$0xf]
        %v927 = vld [vmem:[%s6 + $0x8] sm:$0xf]
        %v928 = vld [vmem:[%s6 + $0xc] sm:$0xf]
        %v929 = vld [vmem:[%s6 + $0x10] sm:$0xf]
        %v930 = vld [vmem:[%s6 + $0x14] sm:$0xf]
        %v931 = vld [vmem:[%s6 + $0x18] sm:$0xf]
        %v932 = vld [vmem:[%s6 + $0x1c] sm:$0xf]
        %v941 = vunpack.c.l.b16 %v925
        %v942 = vunpack.c.l.b16 %v926
        %v943 = vunpack.c.l.b16 %v927
        %v944 = vunpack.c.l.b16 %v928
        %v945 = vunpack.c.l.b16 %v929
        %v946 = vunpack.c.l.b16 %v930
        %v947 = vunpack.c.l.b16 %v931
        %v948 = vunpack.c.l.b16 %v932
        %v949 = vpack.c.b16 %v942, %v941
        %v950 = vpack.c.b16 %v944, %v943
        %v951 = vpack.c.b16 %v946, %v945
        %v952 = vpack.c.b16 %v948, %v947
        %v958 = vsel %vm917, %v924, 0
        %960 = vmatprep.subr.bf16.mxu0 0
        %961 = vmatpush1.bf16.msra.mxu0 %v949
        %962 = vmatprep.subr.bf16.mxu0 0
        %963 = vmatpush1.bf16.msra.mxu0 %v950
        %964 = vmatprep.subr.bf16.mxu0 0
        %965 = vmatpush1.bf16.msra.mxu0 %v951
        %966 = vmatprep.subr.bf16.mxu0 0
        %967 = vmatpush1.bf16.msra.mxu0 %v952
        %968 = vmatprep.subr.bf16.mxu0 0
        %969 = vmatpush1.bf16.msra.mxu0 0
        %970 = vmatprep.subr.bf16.mxu0 0
        %971 = vmatpush1.bf16.msra.mxu0 0
        %972 = vmatprep.subr.bf16.mxu0 0
        %973 = vmatpush1.bf16.msra.mxu0 0
        %974 = vmatprep.subr.bf16.mxu0 0
        %975 = vmatpush1.bf16.msra.mxu0 0
        %976 = vmatprep.subr.bf16.mxu0 0
        %977 = vmatpush1.bf16.msra.mxu0 0
        %978 = vmatprep.subr.bf16.mxu0 0
        %979 = vmatpush1.bf16.msra.mxu0 0
        %980 = vmatprep.subr.bf16.mxu0 0
        %981 = vmatpush1.bf16.msra.mxu0 0
        %982 = vmatprep.subr.bf16.mxu0 0
        %983 = vmatpush1.bf16.msra.mxu0 0
        %984 = vmatprep.subr.bf16.mxu0 0
        %985 = vmatpush1.bf16.msra.mxu0 0
        %986 = vmatprep.subr.bf16.mxu0 0
        %987 = vmatpush1.bf16.msra.mxu0 0
        %988 = vmatprep.subr.bf16.mxu0 0
        %989 = vmatpush1.bf16.msra.mxu0 0
        %990 = vmatprep.subr.bf16.mxu0 0
        %991 = vmatpush1.bf16.msra.mxu0 0
        %992 = vmatprep.mubr.bf16.mxu0 0
        %993 = vmatmul.mubr.bf16.gmra.mrb[0].mxu0 %v958
        %v994 = vpop.f32.mrb[0].mxu0
        %v995 = vadd.f32 0.0, %v994
        %v996 = vpop.f32.mrb[0].mxu0
        %v997 = vpop.f32.mrb[0].mxu0
        %v998 = vpop.f32.mrb[0].mxu0
        %999 = vdwg.mxu0
        %v1000 = vrcp.pop %v995
        %v1001 = vmul.f32 %v923, %v1000
        %v1002 = vsel %vm917, %v1001, 0.0
        %1003 = vst [vmem:[%s320] sm:$0xff] %v1002
        %v1004 = vpack.c.bf16 %v1001, %v1001
        %v1005 = vld [vmem:[%s4] sm:$0xf]
        %v1007 = vsel %vm418, %v1004, 0
        %vm1009 = vcmask 1043456
        %v1011 = vsel %vm1009, %v1005, 0
        %1013 = vmatprep.subr.bf16.mxu0 0
        %1014 = vmatpush1.bf16.msra.mxu0 %v1011
        %1015 = vmatprep.subr.bf16.mxu0 0
        %1016 = vmatpush1.bf16.msra.mxu0 0
        %1017 = vmatprep.subr.bf16.mxu0 0
        %1018 = vmatpush1.bf16.msra.mxu0 0
        %1019 = vmatprep.subr.bf16.mxu0 0
        %1020 = vmatpush1.bf16.msra.mxu0 0
        %1021 = vmatprep.subr.bf16.mxu0 0
        %1022 = vmatpush1.bf16.msra.mxu0 0
        %1023 = vmatprep.subr.bf16.mxu0 0
        %1024 = vmatpush1.bf16.msra.mxu0 0
        %1025 = vmatprep.subr.bf16.mxu0 0
        %1026 = vmatpush1.bf16.msra.mxu0 0
        %1027 = vmatprep.subr.bf16.mxu0 0
        %1028 = vmatpush1.bf16.msra.mxu0 0
        %1029 = vmatprep.subr.bf16.mxu0 0
        %1030 = vmatpush1.bf16.msra.mxu0 0
        %1031 = vmatprep.subr.bf16.mxu0 0
        %1032 = vmatpush1.bf16.msra.mxu0 0
        %1033 = vmatprep.subr.bf16.mxu0 0
        %1034 = vmatpush1.bf16.msra.mxu0 0
        %1035 = vmatprep.subr.bf16.mxu0 0
        %1036 = vmatpush1.bf16.msra.mxu0 0
        %1037 = vmatprep.subr.bf16.mxu0 0
        %1038 = vmatpush1.bf16.msra.mxu0 0
        %1039 = vmatprep.subr.bf16.mxu0 0
        %1040 = vmatpush1.bf16.msra.mxu0 0
        %1041 = vmatprep.subr.bf16.mxu0 0
        %1042 = vmatpush1.bf16.msra.mxu0 0
        %1043 = vmatprep.subr.bf16.mxu0 0
        %1044 = vmatpush1.bf16.msra.mxu0 0
        %1045 = vmatprep.mubr.bf16.mxu0 0
        %1046 = vmatmul.mubr.bf16.gmra.mrb[0].mxu0 %v1007
        %v1047 = vpop.f32.mrb[0].mxu0
        %v1048 = vadd.f32 0.0, %v1047
        %v1049 = vpop.f32.mrb[0].mxu0
        %v1050 = vpop.f32.mrb[0].mxu0
        %v1051 = vpop.f32.mrb[0].mxu0
        %1052 = vdwg.mxu0
        %1053 = vrot.lane.b32.xlu0 %v389, 64
        %v1054 = vpop.permute.xlu0 %1053
        %v1056 = vmul.f32 %v1048, %v1054
        %v1057 = vpack.c.bf16 %v1056, %v1056
        %v1058 = vld [vmem:[%s5] sm:$0xf]
        %v1059 = vld [vmem:[%s5 + $0x4] sm:$0xf]
        %v1060 = vld [vmem:[%s5 + $0x8] sm:$0xf]
        %v1061 = vld [vmem:[%s5 + $0xc] sm:$0xf]
        %v1066 = vunpack.c.l.b16 %v1058
        %v1067 = vunpack.c.l.b16 %v1059
        %v1068 = vunpack.c.l.b16 %v1060
        %v1069 = vunpack.c.l.b16 %v1061
        %v1070 = vpack.c.b16 %v1067, %v1066
        %v1071 = vpack.c.b16 %v1069, %v1068
        %v1075 = vsel %vm350, %v1057, 0
        %1077 = vmatprep.subr.bf16.mxu0 0
        %1078 = vmatpush1.bf16.msra.mxu0 %v1070
        %1079 = vmatprep.subr.bf16.mxu0 0
        %1080 = vmatpush1.bf16.msra.mxu0 %v1071
        %1081 = vmatprep.subr.bf16.mxu0 0
        %1082 = vmatpush1.bf16.msra.mxu0 0
        %1083 = vmatprep.subr.bf16.mxu0 0
        %1084 = vmatpush1.bf16.msra.mxu0 0
        %1085 = vmatprep.subr.bf16.mxu0 0
        %1086 = vmatpush1.bf16.msra.mxu0 0
        %1087 = vmatprep.subr.bf16.mxu0 0
        %1088 = vmatpush1.bf16.msra.mxu0 0
        %1089 = vmatprep.subr.bf16.mxu0 0
        %1090 = vmatpush1.bf16.msra.mxu0 0
        %1091 = vmatprep.subr.bf16.mxu0 0
        %1092 = vmatpush1.bf16.msra.mxu0 0
        %1093 = vmatprep.subr.bf16.mxu0 0
        %1094 = vmatpush1.bf16.msra.mxu0 0
        %1095 = vmatprep.subr.bf16.mxu0 0
        %1096 = vmatpush1.bf16.msra.mxu0 0
        %1097 = vmatprep.subr.bf16.mxu0 0
        %1098 = vmatpush1.bf16.msra.mxu0 0
        %1099 = vmatprep.subr.bf16.mxu0 0
        %1100 = vmatpush1.bf16.msra.mxu0 0
        %1101 = vmatprep.subr.bf16.mxu0 0
        %1102 = vmatpush1.bf16.msra.mxu0 0
        %1103 = vmatprep.subr.bf16.mxu0 0
        %1104 = vmatpush1.bf16.msra.mxu0 0
        %1105 = vmatprep.subr.bf16.mxu0 0
        %1106 = vmatpush1.bf16.msra.mxu0 0
        %1107 = vmatprep.subr.bf16.mxu0 0
        %1108 = vmatpush1.bf16.msra.mxu0 0
        %1109 = vmatprep.mubr.bf16.mxu0 0
        %1110 = vmatmul.mubr.bf16.gmra.mrb[0].mxu0 %v1075
        %v1111 = vpop.f32.mrb[0].mxu0
        %v1112 = vadd.f32 0.0, %v1111
        %v1113 = vpop.f32.mrb[0].mxu0
        %v1114 = vpop.f32.mrb[0].mxu0
        %v1115 = vpop.f32.mrb[0].mxu0
        %1116 = vdwg.mxu0
        %1118 = vrot.lane.b32.xlu0 %v1004, 120
        %v1119 = vpop.permute.xlu0 %1118
        %v1121 = vsel %vm418, %v1119, 0
        %1123 = vmatprep.subr.bf16.mxu0 0
        %1124 = vmatpush1.bf16.msra.mxu0 %v1011
        %1125 = vmatprep.subr.bf16.mxu0 0
        %1126 = vmatpush1.bf16.msra.mxu0 0
        %1127 = vmatprep.subr.bf16.mxu0 0
        %1128 = vmatpush1.bf16.msra.mxu0 0
        %1129 = vmatprep.subr.bf16.mxu0 0
        %1130 = vmatpush1.bf16.msra.mxu0 0
        %1131 = vmatprep.subr.bf16.mxu0 0
        %1132 = vmatpush1.bf16.msra.mxu0 0
        %1133 = vmatprep.subr.bf16.mxu0 0
        %1134 = vmatpush1.bf16.msra.mxu0 0
        %1135 = vmatprep.subr.bf16.mxu0 0
        %1136 = vmatpush1.bf16.msra.mxu0 0
        %1137 = vmatprep.subr.bf16.mxu0 0
        %1138 = vmatpush1.bf16.msra.mxu0 0
        %1139 = vmatprep.subr.bf16.mxu0 0
        %1140 = vmatpush1.bf16.msra.mxu0 0
        %1141 = vmatprep.subr.bf16.mxu0 0
        %1142 = vmatpush1.bf16.msra.mxu0 0
        %1143 = vmatprep.subr.bf16.mxu0 0
        %1144 = vmatpush1.bf16.msra.mxu0 0
        %1145 = vmatprep.subr.bf16.mxu0 0
        %1146 = vmatpush1.bf16.msra.mxu0 0
        %1147 = vmatprep.subr.bf16.mxu0 0
        %1148 = vmatpush1.bf16.msra.mxu0 0
        %1149 = vmatprep.subr.bf16.mxu0 0
        %1150 = vmatpush1.bf16.msra.mxu0 0
        %1151 = vmatprep.subr.bf16.mxu0 0
        %1152 = vmatpush1.bf16.msra.mxu0 0
        %1153 = vmatprep.subr.bf16.mxu0 0
        %1154 = vmatpush1.bf16.msra.mxu0 0
        %1155 = vmatprep.mubr.bf16.mxu0 0
        %1156 = vmatmul.mubr.bf16.gmra.mrb[0].mxu0 %v1121
        %v1157 = vpop.f32.mrb[0].mxu0
        %v1158 = vadd.f32 0.0, %v1157
        %v1159 = vpop.f32.mrb[0].mxu0
        %v1160 = vpop.f32.mrb[0].mxu0
        %v1161 = vpop.f32.mrb[0].mxu0
        %1162 = vdwg.mxu0
        %v1163 = vmul.f32 %v1158, %v1054
        %v1164 = vpack.c.bf16 %v1163, %v1163
        %v1166 = vsel %vm350, %v1164, 0
        %1168 = vmatprep.subr.bf16.mxu0 0
        %1169 = vmatpush1.bf16.msra.mxu0 %v1070
        %1170 = vmatprep.subr.bf16.mxu0 0
        %1171 = vmatpush1.bf16.msra.mxu0 %v1071
        %1172 = vmatprep.subr.bf16.mxu0 0
        %1173 = vmatpush1.bf16.msra.mxu0 0
        %1174 = vmatprep.subr.bf16.mxu0 0
        %1175 = vmatpush1.bf16.msra.mxu0 0
        %1176 = vmatprep.subr.bf16.mxu0 0
        %1177 = vmatpush1.bf16.msra.mxu0 0
        %1178 = vmatprep.subr.bf16.mxu0 0
        %1179 = vmatpush1.bf16.msra.mxu0 0
        %1180 = vmatprep.subr.bf16.mxu0 0
        %1181 = vmatpush1.bf16.msra.mxu0 0
        %1182 = vmatprep.subr.bf16.mxu0 0
        %1183 = vmatpush1.bf16.msra.mxu0 0
        %1184 = vmatprep.subr.bf16.mxu0 0
        %1185 = vmatpush1.bf16.msra.mxu0 0
        %1186 = vmatprep.subr.bf16.mxu0 0
        %1187 = vmatpush1.bf16.msra.mxu0 0
        %1188 = vmatprep.subr.bf16.mxu0 0
        %1189 = vmatpush1.bf16.msra.mxu0 0
        %1190 = vmatprep.subr.bf16.mxu0 0
        %1191 = vmatpush1.bf16.msra.mxu0 0
        %1192 = vmatprep.subr.bf16.mxu0 0
        %1193 = vmatpush1.bf16.msra.mxu0 0
        %1194 = vmatprep.subr.bf16.mxu0 0
        %1195 = vmatpush1.bf16.msra.mxu0 0
        %1196 = vmatprep.subr.bf16.mxu0 0
        %1197 = vmatpush1.bf16.msra.mxu0 0
        %1198 = vmatprep.subr.bf16.mxu0 0
        %1199 = vmatpush1.bf16.msra.mxu0 0
        %1200 = vmatprep.mubr.bf16.mxu0 0
        %1201 = vmatmul.mubr.bf16.gmra.mrb[0].mxu0 %v1166
        %v1202 = vpop.f32.mrb[0].mxu0
        %v1203 = vadd.f32 0.0, %v1202
        %v1204 = vpop.f32.mrb[0].mxu0
        %v1205 = vpop.f32.mrb[0].mxu0
        %v1206 = vpop.f32.mrb[0].mxu0
        %1207 = vdwg.mxu0
        %1208 = vrot.lane.b32.xlu0 %v1004, 112
        %v1209 = vpop.permute.xlu0 %1208
        %v1211 = vsel %vm418, %v1209, 0
        %1213 = vmatprep.subr.bf16.mxu0 0
        %1214 = vmatpush1.bf16.msra.mxu0 %v1011
        %1215 = vmatprep.subr.bf16.mxu0 0
        %1216 = vmatpush1.bf16.msra.mxu0 0
        %1217 = vmatprep.subr.bf16.mxu0 0
        %1218 = vmatpush1.bf16.msra.mxu0 0
        %1219 = vmatprep.subr.bf16.mxu0 0
        %1220 = vmatpush1.bf16.msra.mxu0 0
        %1221 = vmatprep.subr.bf16.mxu0 0
        %1222 = vmatpush1.bf16.msra.mxu0 0
        %1223 = vmatprep.subr.bf16.mxu0 0
        %1224 = vmatpush1.bf16.msra.mxu0 0
        %1225 = vmatprep.subr.bf16.mxu0 0
        %1226 = vmatpush1.bf16.msra.mxu0 0
        %1227 = vmatprep.subr.bf16.mxu0 0
        %1228 = vmatpush1.bf16.msra.mxu0 0
        %1229 = vmatprep.subr.bf16.mxu0 0
        %1230 = vmatpush1.bf16.msra.mxu0 0
        %1231 = vmatprep.subr.bf16.mxu0 0
        %1232 = vmatpush1.bf16.msra.mxu0 0
        %1233 = vmatprep.subr.bf16.mxu0 0
        %1234 = vmatpush1.bf16.msra.mxu0 0
        %1235 = vmatprep.subr.bf16.mxu0 0
        %1236 = vmatpush1.bf16.msra.mxu0 0
        %1237 = vmatprep.subr.bf16.mxu0 0
        %1238 = vmatpush1.bf16.msra.mxu0 0
        %1239 = vmatprep.subr.bf16.mxu0 0
        %1240 = vmatpush1.bf16.msra.mxu0 0
        %1241 = vmatprep.subr.bf16.mxu0 0
        %1242 = vmatpush1.bf16.msra.mxu0 0
        %1243 = vmatprep.subr.bf16.mxu0 0
        %1244 = vmatpush1.bf16.msra.mxu0 0
        %1245 = vmatprep.mubr.bf16.mxu0 0
        %1246 = vmatmul.mubr.bf16.gmra.mrb[0].mxu0 %v1211
        %v1247 = vpop.f32.mrb[0].mxu0
        %v1248 = vadd.f32 0.0, %v1247
        %v1249 = vpop.f32.mrb[0].mxu0
        %v1250 = vpop.f32.mrb[0].mxu0
        %v1251 = vpop.f32.mrb[0].mxu0
        %1252 = vdwg.mxu0
        %v1253 = vmul.f32 %v1248, %v1054
        %v1254 = vpack.c.bf16 %v1253, %v1253
        %v1256 = vsel %vm350, %v1254, 0
        %1258 = vmatprep.subr.bf16.mxu0 0
        %1259 = vmatpush1.bf16.msra.mxu0 %v1070
        %1260 = vmatprep.subr.bf16.mxu0 0
        %1261 = vmatpush1.bf16.msra.mxu0 %v1071
        %1262 = vmatprep.subr.bf16.mxu0 0
        %1263 = vmatpush1.bf16.msra.mxu0 0
        %1264 = vmatprep.subr.bf16.mxu0 0
        %1265 = vmatpush1.bf16.msra.mxu0 0
        %1266 = vmatprep.subr.bf16.mxu0 0
        %1267 = vmatpush1.bf16.msra.mxu0 0
        %1268 = vmatprep.subr.bf16.mxu0 0
        %1269 = vmatpush1.bf16.msra.mxu0 0
        %1270 = vmatprep.subr.bf16.mxu0 0
        %1271 = vmatpush1.bf16.msra.mxu0 0
        %1272 = vmatprep.subr.bf16.mxu0 0
        %1273 = vmatpush1.bf16.msra.mxu0 0
        %1274 = vmatprep.subr.bf16.mxu0 0
        %1275 = vmatpush1.bf16.msra.mxu0 0
        %1276 = vmatprep.subr.bf16.mxu0 0
        %1277 = vmatpush1.bf16.msra.mxu0 0
        %1278 = vmatprep.subr.bf16.mxu0 0
        %1279 = vmatpush1.bf16.msra.mxu0 0
        %1280 = vmatprep.subr.bf16.mxu0 0
        %1281 = vmatpush1.bf16.msra.mxu0 0
        %1282 = vmatprep.subr.bf16.mxu0 0
        %1283 = vmatpush1.bf16.msra.mxu0 0
        %1284 = vmatprep.subr.bf16.mxu0 0
        %1285 = vmatpush1.bf16.msra.mxu0 0
        %1286 = vmatprep.subr.bf16.mxu0 0
        %1287 = vmatpush1.bf16.msra.mxu0 0
        %1288 = vmatprep.subr.bf16.mxu0 0
        %1289 = vmatpush1.bf16.msra.mxu0 0
        %1290 = vmatprep.mubr.bf16.mxu0 0
        %1291 = vmatmul.mubr.bf16.gmra.mrb[0].mxu0 %v1256
        %v1292 = vpop.f32.mrb[0].mxu0
        %v1293 = vadd.f32 0.0, %v1292
        %v1294 = vpop.f32.mrb[0].mxu0
        %v1295 = vpop.f32.mrb[0].mxu0
        %v1296 = vpop.f32.mrb[0].mxu0
        %1297 = vdwg.mxu0
        %1298 = vrot.lane.b32.xlu0 %v1004, 104
        %v1299 = vpop.permute.xlu0 %1298
        %v1301 = vsel %vm418, %v1299, 0
        %1303 = vmatprep.subr.bf16.mxu0 0
        %1304 = vmatpush1.bf16.msra.mxu0 %v1011
        %1305 = vmatprep.subr.bf16.mxu0 0
        %1306 = vmatpush1.bf16.msra.mxu0 0
        %1307 = vmatprep.subr.bf16.mxu0 0
        %1308 = vmatpush1.bf16.msra.mxu0 0
        %1309 = vmatprep.subr.bf16.mxu0 0
        %1310 = vmatpush1.bf16.msra.mxu0 0
        %1311 = vmatprep.subr.bf16.mxu0 0
        %1312 = vmatpush1.bf16.msra.mxu0 0
        %1313 = vmatprep.subr.bf16.mxu0 0
        %1314 = vmatpush1.bf16.msra.mxu0 0
        %1315 = vmatprep.subr.bf16.mxu0 0
        %1316 = vmatpush1.bf16.msra.mxu0 0
        %1317 = vmatprep.subr.bf16.mxu0 0
        %1318 = vmatpush1.bf16.msra.mxu0 0
        %1319 = vmatprep.subr.bf16.mxu0 0
        %1320 = vmatpush1.bf16.msra.mxu0 0
        %1321 = vmatprep.subr.bf16.mxu0 0
        %1322 = vmatpush1.bf16.msra.mxu0 0
        %1323 = vmatprep.subr.bf16.mxu0 0
        %1324 = vmatpush1.bf16.msra.mxu0 0
        %1325 = vmatprep.subr.bf16.mxu0 0
        %1326 = vmatpush1.bf16.msra.mxu0 0
        %1327 = vmatprep.subr.bf16.mxu0 0
        %1328 = vmatpush1.bf16.msra.mxu0 0
        %1329 = vmatprep.subr.bf16.mxu0 0
        %1330 = vmatpush1.bf16.msra.mxu0 0
        %1331 = vmatprep.subr.bf16.mxu0 0
        %1332 = vmatpush1.bf16.msra.mxu0 0
        %1333 = vmatprep.subr.bf16.mxu0 0
        %1334 = vmatpush1.bf16.msra.mxu0 0
        %1335 = vmatprep.mubr.bf16.mxu0 0
        %1336 = vmatmul.mubr.bf16.gmra.mrb[0].mxu0 %v1301
        %v1337 = vpop.f32.mrb[0].mxu0
        %v1338 = vadd.f32 0.0, %v1337
        %v1339 = vpop.f32.mrb[0].mxu0
        %v1340 = vpop.f32.mrb[0].mxu0
        %v1341 = vpop.f32.mrb[0].mxu0
        %1342 = vdwg.mxu0
        %v1343 = vmul.f32 %v1338, %v1054
        %v1344 = vpack.c.bf16 %v1343, %v1343
        %v1346 = vsel %vm350, %v1344, 0
        %1348 = vmatprep.subr.bf16.mxu0 0
        %1349 = vmatpush1.bf16.msra.mxu0 %v1070
        %1350 = vmatprep.subr.bf16.mxu0 0
        %1351 = vmatpush1.bf16.msra.mxu0 %v1071
        %1352 = vmatprep.subr.bf16.mxu0 0
        %1353 = vmatpush1.bf16.msra.mxu0 0
        %1354 = vmatprep.subr.bf16.mxu0 0
        %1355 = vmatpush1.bf16.msra.mxu0 0
        %1356 = vmatprep.subr.bf16.mxu0 0
        %1357 = vmatpush1.bf16.msra.mxu0 0
        %1358 = vmatprep.subr.bf16.mxu0 0
        %1359 = vmatpush1.bf16.msra.mxu0 0
        %1360 = vmatprep.subr.bf16.mxu0 0
        %1361 = vmatpush1.bf16.msra.mxu0 0
        %1362 = vmatprep.subr.bf16.mxu0 0
        %1363 = vmatpush1.bf16.msra.mxu0 0
        %1364 = vmatprep.subr.bf16.mxu0 0
        %1365 = vmatpush1.bf16.msra.mxu0 0
        %1366 = vmatprep.subr.bf16.mxu0 0
        %1367 = vmatpush1.bf16.msra.mxu0 0
        %1368 = vmatprep.subr.bf16.mxu0 0
        %1369 = vmatpush1.bf16.msra.mxu0 0
        %1370 = vmatprep.subr.bf16.mxu0 0
        %1371 = vmatpush1.bf16.msra.mxu0 0
        %1372 = vmatprep.subr.bf16.mxu0 0
        %1373 = vmatpush1.bf16.msra.mxu0 0
        %1374 = vmatprep.subr.bf16.mxu0 0
        %1375 = vmatpush1.bf16.msra.mxu0 0
        %1376 = vmatprep.subr.bf16.mxu0 0
        %1377 = vmatpush1.bf16.msra.mxu0 0
        %1378 = vmatprep.subr.bf16.mxu0 0
        %1379 = vmatpush1.bf16.msra.mxu0 0
        %1380 = vmatprep.mubr.bf16.mxu0 0
        %1381 = vmatmul.mubr.bf16.gmra.mrb[0].mxu0 %v1346
        %v1382 = vpop.f32.mrb[0].mxu0
        %v1383 = vadd.f32 0.0, %v1382
        %v1384 = vpop.f32.mrb[0].mxu0
        %v1385 = vpop.f32.mrb[0].mxu0
        %v1386 = vpop.f32.mrb[0].mxu0
        %1387 = vdwg.mxu0
        %1388 = vrot.lane.b32.xlu0 %v1004, 96
        %v1389 = vpop.permute.xlu0 %1388
        %v1391 = vsel %vm418, %v1389, 0
        %1393 = vmatprep.subr.bf16.mxu0 0
        %1394 = vmatpush1.bf16.msra.mxu0 %v1011
        %1395 = vmatprep.subr.bf16.mxu0 0
        %1396 = vmatpush1.bf16.msra.mxu0 0
        %1397 = vmatprep.subr.bf16.mxu0 0
        %1398 = vmatpush1.bf16.msra.mxu0 0
        %1399 = vmatprep.subr.bf16.mxu0 0
        %1400 = vmatpush1.bf16.msra.mxu0 0
        %1401 = vmatprep.subr.bf16.mxu0 0
        %1402 = vmatpush1.bf16.msra.mxu0 0
        %1403 = vmatprep.subr.bf16.mxu0 0
        %1404 = vmatpush1.bf16.msra.mxu0 0
        %1405 = vmatprep.subr.bf16.mxu0 0
        %1406 = vmatpush1.bf16.msra.mxu0 0
        %1407 = vmatprep.subr.bf16.mxu0 0
        %1408 = vmatpush1.bf16.msra.mxu0 0
        %1409 = vmatprep.subr.bf16.mxu0 0
        %1410 = vmatpush1.bf16.msra.mxu0 0
        %1411 = vmatprep.subr.bf16.mxu0 0
        %1412 = vmatpush1.bf16.msra.mxu0 0
        %1413 = vmatprep.subr.bf16.mxu0 0
        %1414 = vmatpush1.bf16.msra.mxu0 0
        %1415 = vmatprep.subr.bf16.mxu0 0
        %1416 = vmatpush1.bf16.msra.mxu0 0
        %1417 = vmatprep.subr.bf16.mxu0 0
        %1418 = vmatpush1.bf16.msra.mxu0 0
        %1419 = vmatprep.subr.bf16.mxu0 0
        %1420 = vmatpush1.bf16.msra.mxu0 0
        %1421 = vmatprep.subr.bf16.mxu0 0
        %1422 = vmatpush1.bf16.msra.mxu0 0
        %1423 = vmatprep.subr.bf16.mxu0 0
        %1424 = vmatpush1.bf16.msra.mxu0 0
        %1425 = vmatprep.mubr.bf16.mxu0 0
        %1426 = vmatmul.mubr.bf16.gmra.mrb[0].mxu0 %v1391
        %v1427 = vpop.f32.mrb[0].mxu0
        %v1428 = vadd.f32 0.0, %v1427
        %v1429 = vpop.f32.mrb[0].mxu0
        %v1430 = vpop.f32.mrb[0].mxu0
        %v1431 = vpop.f32.mrb[0].mxu0
        %1432 = vdwg.mxu0
        %v1433 = vmul.f32 %v1428, %v1054
        %v1434 = vpack.c.bf16 %v1433, %v1433
        %v1436 = vsel %vm350, %v1434, 0
        %1438 = vmatprep.subr.bf16.mxu0 0
        %1439 = vmatpush1.bf16.msra.mxu0 %v1070
        %1440 = vmatprep.subr.bf16.mxu0 0
        %1441 = vmatpush1.bf16.msra.mxu0 %v1071
        %1442 = vmatprep.subr.bf16.mxu0 0
        %1443 = vmatpush1.bf16.msra.mxu0 0
        %1444 = vmatprep.subr.bf16.mxu0 0
        %1445 = vmatpush1.bf16.msra.mxu0 0
        %1446 = vmatprep.subr.bf16.mxu0 0
        %1447 = vmatpush1.bf16.msra.mxu0 0
        %1448 = vmatprep.subr.bf16.mxu0 0
        %1449 = vmatpush1.bf16.msra.mxu0 0
        %1450 = vmatprep.subr.bf16.mxu0 0
        %1451 = vmatpush1.bf16.msra.mxu0 0
        %1452 = vmatprep.subr.bf16.mxu0 0
        %1453 = vmatpush1.bf16.msra.mxu0 0
        %1454 = vmatprep.subr.bf16.mxu0 0
        %1455 = vmatpush1.bf16.msra.mxu0 0
        %1456 = vmatprep.subr.bf16.mxu0 0
        %1457 = vmatpush1.bf16.msra.mxu0 0
        %1458 = vmatprep.subr.bf16.mxu0 0
        %1459 = vmatpush1.bf16.msra.mxu0 0
        %1460 = vmatprep.subr.bf16.mxu0 0
        %1461 = vmatpush1.bf16.msra.mxu0 0
        %1462 = vmatprep.subr.bf16.mxu0 0
        %1463 = vmatpush1.bf16.msra.mxu0 0
        %1464 = vmatprep.subr.bf16.mxu0 0
        %1465 = vmatpush1.bf16.msra.mxu0 0
        %1466 = vmatprep.subr.bf16.mxu0 0
        %1467 = vmatpush1.bf16.msra.mxu0 0
        %1468 = vmatprep.subr.bf16.mxu0 0
        %1469 = vmatpush1.bf16.msra.mxu0 0
        %1470 = vmatprep.mubr.bf16.mxu0 0
        %1471 = vmatmul.mubr.bf16.gmra.mrb[0].mxu0 %v1436
        %v1472 = vpop.f32.mrb[0].mxu0
        %v1473 = vadd.f32 0.0, %v1472
        %v1474 = vpop.f32.mrb[0].mxu0
        %v1475 = vpop.f32.mrb[0].mxu0
        %v1476 = vpop.f32.mrb[0].mxu0
        %1477 = vdwg.mxu0
        %1478 = vrot.lane.b32.xlu0 %v1004, 88
        %v1479 = vpop.permute.xlu0 %1478
        %v1481 = vsel %vm418, %v1479, 0
        %1483 = vmatprep.subr.bf16.mxu0 0
        %1484 = vmatpush1.bf16.msra.mxu0 %v1011
        %1485 = vmatprep.subr.bf16.mxu0 0
        %1486 = vmatpush1.bf16.msra.mxu0 0
        %1487 = vmatprep.subr.bf16.mxu0 0
        %1488 = vmatpush1.bf16.msra.mxu0 0
        %1489 = vmatprep.subr.bf16.mxu0 0
        %1490 = vmatpush1.bf16.msra.mxu0 0
        %1491 = vmatprep.subr.bf16.mxu0 0
        %1492 = vmatpush1.bf16.msra.mxu0 0
        %1493 = vmatprep.subr.bf16.mxu0 0
        %1494 = vmatpush1.bf16.msra.mxu0 0
        %1495 = vmatprep.subr.bf16.mxu0 0
        %1496 = vmatpush1.bf16.msra.mxu0 0
        %1497 = vmatprep.subr.bf16.mxu0 0
        %1498 = vmatpush1.bf16.msra.mxu0 0
        %1499 = vmatprep.subr.bf16.mxu0 0
        %1500 = vmatpush1.bf16.msra.mxu0 0
        %1501 = vmatprep.subr.bf16.mxu0 0
        %1502 = vmatpush1.bf16.msra.mxu0 0
        %1503 = vmatprep.subr.bf16.mxu0 0
        %1504 = vmatpush1.bf16.msra.mxu0 0
        %1505 = vmatprep.subr.bf16.mxu0 0
        %1506 = vmatpush1.bf16.msra.mxu0 0
        %1507 = vmatprep.subr.bf16.mxu0 0
        %1508 = vmatpush1.bf16.msra.mxu0 0
        %1509 = vmatprep.subr.bf16.mxu0 0
        %1510 = vmatpush1.bf16.msra.mxu0 0
        %1511 = vmatprep.subr.bf16.mxu0 0
        %1512 = vmatpush1.bf16.msra.mxu0 0
        %1513 = vmatprep.subr.bf16.mxu0 0
        %1514 = vmatpush1.bf16.msra.mxu0 0
        %1515 = vmatprep.mubr.bf16.mxu0 0
        %1516 = vmatmul.mubr.bf16.gmra.mrb[0].mxu0 %v1481
        %v1517 = vpop.f32.mrb[0].mxu0
        %v1518 = vadd.f32 0.0, %v1517
        %v1519 = vpop.f32.mrb[0].mxu0
        %v1520 = vpop.f32.mrb[0].mxu0
        %v1521 = vpop.f32.mrb[0].mxu0
        %1522 = vdwg.mxu0
        %v1523 = vmul.f32 %v1518, %v1054
        %v1524 = vpack.c.bf16 %v1523, %v1523
        %v1526 = vsel %vm350, %v1524, 0
        %1528 = vmatprep.subr.bf16.mxu0 0
        %1529 = vmatpush1.bf16.msra.mxu0 %v1070
        %1530 = vmatprep.subr.bf16.mxu0 0
        %1531 = vmatpush1.bf16.msra.mxu0 %v1071
        %1532 = vmatprep.subr.bf16.mxu0 0
        %1533 = vmatpush1.bf16.msra.mxu0 0
        %1534 = vmatprep.subr.bf16.mxu0 0
        %1535 = vmatpush1.bf16.msra.mxu0 0
        %1536 = vmatprep.subr.bf16.mxu0 0
        %1537 = vmatpush1.bf16.msra.mxu0 0
        %1538 = vmatprep.subr.bf16.mxu0 0
        %1539 = vmatpush1.bf16.msra.mxu0 0
        %1540 = vmatprep.subr.bf16.mxu0 0
        %1541 = vmatpush1.bf16.msra.mxu0 0
        %1542 = vmatprep.subr.bf16.mxu0 0
        %1543 = vmatpush1.bf16.msra.mxu0 0
        %1544 = vmatprep.subr.bf16.mxu0 0
        %1545 = vmatpush1.bf16.msra.mxu0 0
        %1546 = vmatprep.subr.bf16.mxu0 0
        %1547 = vmatpush1.bf16.msra.mxu0 0
        %1548 = vmatprep.subr.bf16.mxu0 0
        %1549 = vmatpush1.bf16.msra.mxu0 0
        %1550 = vmatprep.subr.bf16.mxu0 0
        %1551 = vmatpush1.bf16.msra.mxu0 0
        %1552 = vmatprep.subr.bf16.mxu0 0
        %1553 = vmatpush1.bf16.msra.mxu0 0
        %1554 = vmatprep.subr.bf16.mxu0 0
        %1555 = vmatpush1.bf16.msra.mxu0 0
        %1556 = vmatprep.subr.bf16.mxu0 0
        %1557 = vmatpush1.bf16.msra.mxu0 0
        %1558 = vmatprep.subr.bf16.mxu0 0
        %1559 = vmatpush1.bf16.msra.mxu0 0
        %1560 = vmatprep.mubr.bf16.mxu0 0
        %1561 = vmatmul.mubr.bf16.gmra.mrb[0].mxu0 %v1526
        %v1562 = vpop.f32.mrb[0].mxu0
        %v1563 = vadd.f32 0.0, %v1562
        %v1564 = vpop.f32.mrb[0].mxu0
        %v1565 = vpop.f32.mrb[0].mxu0
        %v1566 = vpop.f32.mrb[0].mxu0
        %1567 = vdwg.mxu0
        %1568 = vrot.lane.b32.xlu0 %v1004, 80
        %v1569 = vpop.permute.xlu0 %1568
        %v1571 = vsel %vm418, %v1569, 0
        %1573 = vmatprep.subr.bf16.mxu0 0
        %1574 = vmatpush1.bf16.msra.mxu0 %v1011
        %1575 = vmatprep.subr.bf16.mxu0 0
        %1576 = vmatpush1.bf16.msra.mxu0 0
        %1577 = vmatprep.subr.bf16.mxu0 0
        %1578 = vmatpush1.bf16.msra.mxu0 0
        %1579 = vmatprep.subr.bf16.mxu0 0
        %1580 = vmatpush1.bf16.msra.mxu0 0
        %1581 = vmatprep.subr.bf16.mxu0 0
        %1582 = vmatpush1.bf16.msra.mxu0 0
        %1583 = vmatprep.subr.bf16.mxu0 0
        %1584 = vmatpush1.bf16.msra.mxu0 0
        %1585 = vmatprep.subr.bf16.mxu0 0
        %1586 = vmatpush1.bf16.msra.mxu0 0
        %1587 = vmatprep.subr.bf16.mxu0 0
        %1588 = vmatpush1.bf16.msra.mxu0 0
        %1589 = vmatprep.subr.bf16.mxu0 0
        %1590 = vmatpush1.bf16.msra.mxu0 0
        %1591 = vmatprep.subr.bf16.mxu0 0
        %1592 = vmatpush1.bf16.msra.mxu0 0
        %1593 = vmatprep.subr.bf16.mxu0 0
        %1594 = vmatpush1.bf16.msra.mxu0 0
        %1595 = vmatprep.subr.bf16.mxu0 0
        %1596 = vmatpush1.bf16.msra.mxu0 0
        %1597 = vmatprep.subr.bf16.mxu0 0
        %1598 = vmatpush1.bf16.msra.mxu0 0
        %1599 = vmatprep.subr.bf16.mxu0 0
        %1600 = vmatpush1.bf16.msra.mxu0 0
        %1601 = vmatprep.subr.bf16.mxu0 0
        %1602 = vmatpush1.bf16.msra.mxu0 0
        %1603 = vmatprep.subr.bf16.mxu0 0
        %1604 = vmatpush1.bf16.msra.mxu0 0
        %1605 = vmatprep.mubr.bf16.mxu0 0
        %1606 = vmatmul.mubr.bf16.gmra.mrb[0].mxu0 %v1571
        %v1607 = vpop.f32.mrb[0].mxu0
        %v1608 = vadd.f32 0.0, %v1607
        %v1609 = vpop.f32.mrb[0].mxu0
        %v1610 = vpop.f32.mrb[0].mxu0
        %v1611 = vpop.f32.mrb[0].mxu0
        %1612 = vdwg.mxu0
        %v1613 = vmul.f32 %v1608, %v1054
        %v1614 = vpack.c.bf16 %v1613, %v1613
        %v1616 = vsel %vm350, %v1614, 0
        %1618 = vmatprep.subr.bf16.mxu0 0
        %1619 = vmatpush1.bf16.msra.mxu0 %v1070
        %1620 = vmatprep.subr.bf16.mxu0 0
        %1621 = vmatpush1.bf16.msra.mxu0 %v1071
        %1622 = vmatprep.subr.bf16.mxu0 0
        %1623 = vmatpush1.bf16.msra.mxu0 0
        %1624 = vmatprep.subr.bf16.mxu0 0
        %1625 = vmatpush1.bf16.msra.mxu0 0
        %1626 = vmatprep.subr.bf16.mxu0 0
        %1627 = vmatpush1.bf16.msra.mxu0 0
        %1628 = vmatprep.subr.bf16.mxu0 0
        %1629 = vmatpush1.bf16.msra.mxu0 0
        %1630 = vmatprep.subr.bf16.mxu0 0
        %1631 = vmatpush1.bf16.msra.mxu0 0
        %1632 = vmatprep.subr.bf16.mxu0 0
        %1633 = vmatpush1.bf16.msra.mxu0 0
        %1634 = vmatprep.subr.bf16.mxu0 0
        %1635 = vmatpush1.bf16.msra.mxu0 0
        %1636 = vmatprep.subr.bf16.mxu0 0
        %1637 = vmatpush1.bf16.msra.mxu0 0
        %1638 = vmatprep.subr.bf16.mxu0 0
        %1639 = vmatpush1.bf16.msra.mxu0 0
        %1640 = vmatprep.subr.bf16.mxu0 0
        %1641 = vmatpush1.bf16.msra.mxu0 0
        %1642 = vmatprep.subr.bf16.mxu0 0
        %1643 = vmatpush1.bf16.msra.mxu0 0
        %1644 = vmatprep.subr.bf16.mxu0 0
        %1645 = vmatpush1.bf16.msra.mxu0 0
        %1646 = vmatprep.subr.bf16.mxu0 0
        %1647 = vmatpush1.bf16.msra.mxu0 0
        %1648 = vmatprep.subr.bf16.mxu0 0
        %1649 = vmatpush1.bf16.msra.mxu0 0
        %1650 = vmatprep.mubr.bf16.mxu0 0
        %1651 = vmatmul.mubr.bf16.gmra.mrb[0].mxu0 %v1616
        %v1652 = vpop.f32.mrb[0].mxu0
        %v1653 = vadd.f32 0.0, %v1652
        %v1654 = vpop.f32.mrb[0].mxu0
        %v1655 = vpop.f32.mrb[0].mxu0
        %v1656 = vpop.f32.mrb[0].mxu0
        %1657 = vdwg.mxu0
        %1658 = vrot.lane.b32.xlu0 %v1004, 72
        %v1659 = vpop.permute.xlu0 %1658
        %v1661 = vsel %vm418, %v1659, 0
        %1663 = vmatprep.subr.bf16.mxu0 0
        %1664 = vmatpush1.bf16.msra.mxu0 %v1011
        %1665 = vmatprep.subr.bf16.mxu0 0
        %1666 = vmatpush1.bf16.msra.mxu0 0
        %1667 = vmatprep.subr.bf16.mxu0 0
        %1668 = vmatpush1.bf16.msra.mxu0 0
        %1669 = vmatprep.subr.bf16.mxu0 0
        %1670 = vmatpush1.bf16.msra.mxu0 0
        %1671 = vmatprep.subr.bf16.mxu0 0
        %1672 = vmatpush1.bf16.msra.mxu0 0
        %1673 = vmatprep.subr.bf16.mxu0 0
        %1674 = vmatpush1.bf16.msra.mxu0 0
        %1675 = vmatprep.subr.bf16.mxu0 0
        %1676 = vmatpush1.bf16.msra.mxu0 0
        %1677 = vmatprep.subr.bf16.mxu0 0
        %1678 = vmatpush1.bf16.msra.mxu0 0
        %1679 = vmatprep.subr.bf16.mxu0 0
        %1680 = vmatpush1.bf16.msra.mxu0 0
        %1681 = vmatprep.subr.bf16.mxu0 0
        %1682 = vmatpush1.bf16.msra.mxu0 0
        %1683 = vmatprep.subr.bf16.mxu0 0
        %1684 = vmatpush1.bf16.msra.mxu0 0
        %1685 = vmatprep.subr.bf16.mxu0 0
        %1686 = vmatpush1.bf16.msra.mxu0 0
        %1687 = vmatprep.subr.bf16.mxu0 0
        %1688 = vmatpush1.bf16.msra.mxu0 0
        %1689 = vmatprep.subr.bf16.mxu0 0
        %1690 = vmatpush1.bf16.msra.mxu0 0
        %1691 = vmatprep.subr.bf16.mxu0 0
        %1692 = vmatpush1.bf16.msra.mxu0 0
        %1693 = vmatprep.subr.bf16.mxu0 0
        %1694 = vmatpush1.bf16.msra.mxu0 0
        %1695 = vmatprep.mubr.bf16.mxu0 0
        %1696 = vmatmul.mubr.bf16.gmra.mrb[0].mxu0 %v1661
        %v1697 = vpop.f32.mrb[0].mxu0
        %v1698 = vadd.f32 0.0, %v1697
        %v1699 = vpop.f32.mrb[0].mxu0
        %v1700 = vpop.f32.mrb[0].mxu0
        %v1701 = vpop.f32.mrb[0].mxu0
        %1702 = vdwg.mxu0
        %v1703 = vmul.f32 %v1698, %v1054
        %v1704 = vpack.c.bf16 %v1703, %v1703
        %v1706 = vsel %vm350, %v1704, 0
        %1708 = vmatprep.subr.bf16.mxu0 0
        %1709 = vmatpush1.bf16.msra.mxu0 %v1070
        %1710 = vmatprep.subr.bf16.mxu0 0
        %1711 = vmatpush1.bf16.msra.mxu0 %v1071
        %1712 = vmatprep.subr.bf16.mxu0 0
        %1713 = vmatpush1.bf16.msra.mxu0 0
        %1714 = vmatprep.subr.bf16.mxu0 0
        %1715 = vmatpush1.bf16.msra.mxu0 0
        %1716 = vmatprep.subr.bf16.mxu0 0
        %1717 = vmatpush1.bf16.msra.mxu0 0
        %1718 = vmatprep.subr.bf16.mxu0 0
        %1719 = vmatpush1.bf16.msra.mxu0 0
        %1720 = vmatprep.subr.bf16.mxu0 0
        %1721 = vmatpush1.bf16.msra.mxu0 0
        %1722 = vmatprep.subr.bf16.mxu0 0
        %1723 = vmatpush1.bf16.msra.mxu0 0
        %1724 = vmatprep.subr.bf16.mxu0 0
        %1725 = vmatpush1.bf16.msra.mxu0 0
        %1726 = vmatprep.subr.bf16.mxu0 0
        %1727 = vmatpush1.bf16.msra.mxu0 0
        %1728 = vmatprep.subr.bf16.mxu0 0
        %1729 = vmatpush1.bf16.msra.mxu0 0
        %1730 = vmatprep.subr.bf16.mxu0 0
        %1731 = vmatpush1.bf16.msra.mxu0 0
        %1732 = vmatprep.subr.bf16.mxu0 0
        %1733 = vmatpush1.bf16.msra.mxu0 0
        %1734 = vmatprep.subr.bf16.mxu0 0
        %1735 = vmatpush1.bf16.msra.mxu0 0
        %1736 = vmatprep.subr.bf16.mxu0 0
        %1737 = vmatpush1.bf16.msra.mxu0 0
        %1738 = vmatprep.subr.bf16.mxu0 0
        %1739 = vmatpush1.bf16.msra.mxu0 0
        %1740 = vmatprep.mubr.bf16.mxu0 0
        %1741 = vmatmul.mubr.bf16.gmra.mrb[0].mxu0 %v1706
        %v1742 = vpop.f32.mrb[0].mxu0
        %v1743 = vadd.f32 0.0, %v1742
        %v1744 = vpop.f32.mrb[0].mxu0
        %v1745 = vpop.f32.mrb[0].mxu0
        %v1746 = vpop.f32.mrb[0].mxu0
        %1747 = vdwg.mxu0
        %1749 = vrot.lane.b32.xlu0 %v1203, 4
        %v1750 = vpop.permute.xlu0 %1749
        %1753 = vrot.lane.b32.xlu0 %v1293, 8
        %v1754 = vpop.permute.xlu0 %1753
        %1757 = vrot.lane.b32.xlu0 %v1383, 12
        %v1758 = vpop.permute.xlu0 %1757
        %1761 = vrot.lane.b32.xlu0 %v1473, 16
        %v1762 = vpop.permute.xlu0 %1761
        %1765 = vrot.lane.b32.xlu0 %v1563, 20
        %v1766 = vpop.permute.xlu0 %1765
        %1769 = vrot.lane.b32.xlu0 %v1653, 24
        %v1770 = vpop.permute.xlu0 %1769
        %1773 = vrot.lane.b32.xlu0 %v1743, 28
        %v1774 = vpop.permute.xlu0 %1773
        %v1776 = vsel %vm416, %v1112, %v1750
        %v1777 = vsel %vm418, %v1776, %v1754
        %v1778 = vsel %vm420, %v1777, %v1758
        %v1779 = vsel %vm422, %v1778, %v1762
        %v1780 = vsel %vm424, %v1779, %v1766
        %v1781 = vsel %vm426, %v1780, %v1770
        %v1782 = vsel %vm428, %v1781, %v1774
        %v1783 = vpack.c.bf16 %v1782, %v1782
        %vm1784 = vcmask 257024
        %1785 = vst.msk [vmem:[%s313] sm:$0xf] %vm1784, %v1783
        %s1786 = sand.u32 %s187, 1
        %s1787 = scalar_lea.sflag [#allocation4], %s1786
        %s1788 = sand.u32 %s187, 1
        %s1789 = smul.addr %s1788, 4
        %s1790 = scalar_lea.vmem [#allocation5], %s1789
        %s1791 = sand.u32 %s213, 1
        %s1792 = scalar_lea.sflag [#allocation7], %s1791
        %s1793 = sand.u32 %s213, 1
        %s1794 = smul.addr %s1793, 8
        %s1795 = scalar_lea.vmem [#allocation6], %s1794
        // Predicated region
        $region53: #{tpu_custom_call.1} parent=47 // pred_check
          %p1796 = pneg %p197
        $region54: #{tpu_custom_call.1} parent=47 // pred_check_branch
          %1798 = sbr.rel (%p1796) target = $region56
        $region55: #{tpu_custom_call.1} parent=47 // pred_region
          %s1800 = ssub.s32 64, 64
          %1801 = vsyncadd %s1787, %s1800
          %s1802 = smul.addr %s27, 64
          %s1803 = scalar_lea.hbm %s7, %s1802
          %s1805 = sshll.u32 %s1790, 4
          %s1806 = int_to_ptr.vmem [resolvable:$true] %s1805
          %1808 = dma.vmem_to_hbm [thread:$0]  %s1806, 64, %s1803, %s1787
        $region56: #{tpu_custom_call.1} parent=47 // pred_fallthru
          _
        // Predicated region
        $region57: #{tpu_custom_call.1} parent=47 // pred_check
          %p1809 = pneg %p223
        $region58: #{tpu_custom_call.1} parent=47 // pred_check_branch
          %1811 = sbr.rel (%p1809) target = $region60
        $region59: #{tpu_custom_call.1} parent=47 // pred_region
          %s1813 = ssub.s32 128, 128
          %1814 = vsyncadd %s1792, %s1813
          %s1815 = smul.addr %s27, 128
          %s1816 = scalar_lea.hbm %s8, %s1815
          %s1818 = sshll.u32 %s1795, 4
          %s1819 = int_to_ptr.vmem [resolvable:$true] %s1818
          %1821 = dma.vmem_to_hbm [thread:$0]  %s1819, 128, %s1816, %s1792
        $region60: #{tpu_custom_call.1} parent=47 // pred_fallthru
          _
      $region48: #{tpu_custom_call.1} parent=5 // pred_fallthru
        _
      %p1822 = scmp.le.s32.totalorder 2, %s22
      // Predicated region
      $region61: #{tpu_custom_call.1} parent=5 // pred_check
        %p1823 = pneg %p1822
      $region62: #{tpu_custom_call.1} parent=5 // pred_check_branch
        %1825 = sbr.rel (%p1823) target = $region64
      $region63: #{tpu_custom_call.1} parent=5 // pred_region
        %s1826 = ssub.s32 %s22, 2
        // Predicated region
        $region65: #{tpu_custom_call.1} parent=63 // pred_check
          %p1827 = pneg %p203
        $region66: #{tpu_custom_call.1} parent=63 // pred_check_branch
          %1829 = sbr.rel (%p1827) target = $region68
        $region67: #{tpu_custom_call.1} parent=63 // pred_region
          %s1830 = sand.u32 %s188, 1
          %s1831 = scalar_lea.sflag [#allocation4], %s1830
          %s1832 = sand.u32 %s188, 1
          %s1833 = smul.addr %s1832, 4
          %s1834 = scalar_lea.vmem [#allocation5], %s1833
          %1835 = dma.done %s1831, 64
        $region68: #{tpu_custom_call.1} parent=63 // pred_fallthru
          _
        // Predicated region
        $region69: #{tpu_custom_call.1} parent=63 // pred_check
          %p1836 = pneg %p229
        $region70: #{tpu_custom_call.1} parent=63 // pred_check_branch
          %1838 = sbr.rel (%p1836) target = $region72
        $region71: #{tpu_custom_call.1} parent=63 // pred_region
          %s1839 = sand.u32 %s214, 1
          %s1840 = scalar_lea.sflag [#allocation7], %s1839
          %s1841 = sand.u32 %s214, 1
          %s1842 = smul.addr %s1841, 8
          %s1843 = scalar_lea.vmem [#allocation6], %s1842
          %1844 = dma.done %s1840, 128
        $region72: #{tpu_custom_call.1} parent=63 // pred_fallthru
          _
      $region64: #{tpu_custom_call.1} parent=5 // pred_fallthru
        _
    $region6: #{tpu_custom_call.1} parent=1 // loop_footer
      %s26 = sadd.s32 1, %s22
    $region7: #{tpu_custom_call.1} parent=1 // loop_footer_branch
      %21 = sbr.rel target = $region3
    $region8: #{tpu_custom_call.1} parent=1 // loop_exit
      _
    %1845 = vsyncpa [#allocation3], 1
    %s1846 = scalar_lea.sflag [#allocation3], 1
    %1847 = vsyncpa %s1846, 1
    %1848 = vsyncpa [#allocation4], 1
    %s1849 = scalar_lea.sflag [#allocation4], 1
    %1850 = vsyncpa %s1849, 1
    %1851 = vsyncpa [#allocation7], 1
    %s1852 = scalar_lea.sflag [#allocation7], 1
    %1853 = vsyncpa %s1852, 1

</llo_original>
